<compile_context>
chip_gen: v5e
topology: v5e:2x2
jax: 0.10.0
libtpu: 0.0.40
codegen_flags: <defaults>
</compile_context>

<pallas_src>
import jax
import jax.numpy as jnp
from jax.experimental import pallas as pl
from jax.experimental.pallas import tpu as pltpu


# ----------------------------------------------------------------------------
# Kernel (single invocation, serial loop over T inside)
# ----------------------------------------------------------------------------
def critic_kernel(
    # sequence inputs, flattened time-major: (T*B, dim)
    lidar_ref, pos_ref, act_ref,
    # packed initial carries (B, 2H): [stream1 | stream2]
    h0_ref, c0_ref,
    # lidar compress net
    wl1_ref, bl1_ref, wl2_ref, bl2_ref, wl3_ref, bl3_ref,
    # fused LSTM input projection (row-split of interleaved (D, 8H) weight)
    wf_ref, wp_ref, wa_ref, bin_ref,
    # fused block-diagonal recurrent weight (2H, 8H)
    whh_ref,
    # fused Q heads: (2H, 2H)+(1,2H), (2H, 2)+(1,2)
    wq1_ref, bq1_ref, wq2_ref, bq2_ref,
    # output (T*B, 2): column 0 = q1, column 1 = q2
    q_ref,
    # scratch: hidden states for all timesteps (T*B, 2H)
    hseq_ref,
):
    TB = lidar_ref.shape[0]
    B, H2 = h0_ref.shape              # H2 = 2H (both streams packed)
    T = TB // B

    # ---- lidar compress MLP, all timesteps at once (T*B rows) ---------------
    x = lidar_ref[...]
    f = jax.nn.relu(
        jnp.dot(x, wl1_ref[...], preferred_element_type=jnp.float32) + bl1_ref[...])
    f = jax.nn.relu(
        jnp.dot(f, wl2_ref[...], preferred_element_type=jnp.float32) + bl2_ref[...])
    feat = jnp.dot(f, wl3_ref[...], preferred_element_type=jnp.float32) + bl3_ref[...]

    # ---- fused LSTM input projection for both streams, all timesteps --------
    # (no concat: W_ih split by rows; b_ih + b_hh folded into bin)
    gates_in = (
        jnp.dot(feat, wf_ref[...], preferred_element_type=jnp.float32)
        + jnp.dot(pos_ref[...], wp_ref[...], preferred_element_type=jnp.float32)
        + jnp.dot(act_ref[...], wa_ref[...], preferred_element_type=jnp.float32)
        + bin_ref[...])                                            # (T*B, 8H)

    # ---- serial recurrence: one fused matmul + gates per step ---------------
    # fused gate layout (columns): [i1,i2, f1,f2, g1,g2, o1,o2], each block H wide
    whh = whh_ref[...]
    h = h0_ref[...]                                                # (B, 2H)
    c = c0_ref[...]
    for t in range(T):                                             # static, tiny T
        g = gates_in[t * B:(t + 1) * B, :] + jnp.dot(
            h, whh, preferred_element_type=jnp.float32)            # (B, 8H)
        i_g = jax.nn.sigmoid(g[:, 0 * H2:1 * H2])
        f_g = jax.nn.sigmoid(g[:, 1 * H2:2 * H2])
        g_g = jnp.tanh(g[:, 2 * H2:3 * H2])
        o_g = jax.nn.sigmoid(g[:, 3 * H2:4 * H2])
        c = f_g * c + i_g * g_g
        h = o_g * jnp.tanh(c)
        hseq_ref[t * B:(t + 1) * B, :] = h

    # ---- fused Q heads on all T*B rows at once -------------------------------
    hs = hseq_ref[...]                                             # (T*B, 2H)
    qh = jax.nn.relu(
        jnp.dot(hs, wq1_ref[...], preferred_element_type=jnp.float32) + bq1_ref[...])
    q_ref[...] = (
        jnp.dot(qh, wq2_ref[...], preferred_element_type=jnp.float32) + bq2_ref[...])


# ----------------------------------------------------------------------------
# Wrapper: weight fusion / packing + pallas_call
# ----------------------------------------------------------------------------
def _interleave_gates(w1, w2, H):
    """Interleave the 4 gate blocks of two (rows, 4H) weights -> (rows, 8H)
    with column layout [i1,i2, f1,f2, g1,g2, o1,o2]."""
    parts = []
    for g in range(4):
        parts.append(w1[..., g * H:(g + 1) * H])
        parts.append(w2[..., g * H:(g + 1) * H])
    return jnp.concatenate(parts, axis=-1)


def _block_diag2(a, b):
    za = jnp.zeros((a.shape[0], b.shape[1]), a.dtype)
    zb = jnp.zeros((b.shape[0], a.shape[1]), b.dtype)
    top = jnp.concatenate([a, za], axis=1)
    bot = jnp.concatenate([zb, b], axis=1)
    return jnp.concatenate([top, bot], axis=0)


def critic_forward(params, lidar_state, position_robot_state, action,
                   hidden1, hidden2):
    """lidar_state: (B,T,L), position_robot_state: (B,T,P), action: (B,T,A)
       hidden1/hidden2: tuples (h0, c0) each of shape (1, B, H).
       Returns (q1, q2) each of shape (B, T, 1), like the PyTorch module."""
    p = params
    B, T, L = lidar_state.shape
    P = position_robot_state.shape[-1]
    A = action.shape[-1]
    H = p["whh1"].shape[0]
    F_ = p["wl3"].shape[1]
    f32 = jnp.float32

    # ---- flatten sequences time-major: row index = t*B + b -------------------
    lidar_flat = jnp.transpose(lidar_state, (1, 0, 2)).reshape(T * B, L).astype(f32)
    pos_flat = jnp.transpose(position_robot_state, (1, 0, 2)).reshape(T * B, P).astype(f32)
    act_flat = jnp.transpose(action, (1, 0, 2)).reshape(T * B, A).astype(f32)

    # ---- pack initial carries: (B, 2H) = [stream1 | stream2] -----------------
    h0 = jnp.concatenate([hidden1[0][0], hidden2[0][0]], axis=-1).astype(f32)
    c0 = jnp.concatenate([hidden1[1][0], hidden2[1][0]], axis=-1).astype(f32)

    # ---- fuse LSTM weights ----------------------------------------------------
    wih = _interleave_gates(p["wih1"], p["wih2"], H)               # (D, 8H)
    wf = wih[:F_]                                                  # (F, 8H)
    wp = wih[F_:F_ + P]                                            # (P, 8H)
    wa = wih[F_ + P:]                                              # (A, 8H)
    b_in = _interleave_gates(p["bih1"] + p["bhh1"],
                             p["bih2"] + p["bhh2"], H)             # (1, 8H)

    zH = jnp.zeros((H, 4 * H), f32)
    whh_blk = _interleave_gates(
        jnp.concatenate([p["whh1"], zH], axis=0),                  # (2H, 4H)
        jnp.concatenate([zH, p["whh2"]], axis=0), H)               # -> (2H, 8H)

    # ---- fuse Q heads ---------------------------------------------------------
    wq1 = _block_diag2(p["w2"], p["w5"])                           # (2H, 2H)
    bq1 = jnp.concatenate([p["b2"], p["b5"]], axis=-1)             # (1, 2H)
    wq2 = _block_diag2(p["w3"], p["w6"])                           # (2H, 2)
    bq2 = jnp.concatenate([p["b3"], p["b6"]], axis=-1)             # (1, 2)

    inputs = (
        lidar_flat, pos_flat, act_flat, h0, c0,
        p["wl1"], p["bl1"], p["wl2"], p["bl2"], p["wl3"], p["bl3"],
        wf, wp, wa, b_in, whh_blk,
        wq1, bq1, wq2, bq2,
    )
    vmem_spec = pl.BlockSpec(memory_space=pltpu.MemorySpace.VMEM)

    q_flat = pl.pallas_call(
        critic_kernel,
        out_shape=jax.ShapeDtypeStruct((T * B, 2), f32),
        in_specs=[vmem_spec] * len(inputs),
        out_specs=vmem_spec,
        scratch_shapes=[pltpu.VMEM((T * B, 2 * H), f32)],
    )(*inputs)

    q = jnp.transpose(q_flat.reshape(T, B, 2), (1, 0, 2))          # (B, T, 2)
    return q[..., 0:1], q[..., 1:2]


# ----------------------------------------------------------------------------
# Pure-JAX reference (for correctness check)
# ----------------------------------------------------------------------------
def critic_reference(params, lidar, pos, act, hidden1, hidden2):
    p = params
    f = jax.nn.relu(lidar @ p["wl1"] + p["bl1"])
    f = jax.nn.relu(f @ p["wl2"] + p["bl2"])
    feat = f @ p["wl3"] + p["bl3"]
    sa = jnp.concatenate([feat, pos, act], axis=-1)       # (B, T, D)

    def run_lstm(sa, h0, c0, wih, whh, bih, bhh):
        H = h0.shape[-1]

        def step(carry, x_t):
            h, c = carry
            gates = x_t @ wih + bih + h @ whh + bhh
            i_g = jax.nn.sigmoid(gates[:, 0 * H:1 * H])
            f_g = jax.nn.sigmoid(gates[:, 1 * H:2 * H])
            g_g = jnp.tanh(gates[:, 2 * H:3 * H])
            o_g = jax.nn.sigmoid(gates[:, 3 * H:4 * H])
            c_new = f_g * c + i_g * g_g
            h_new = o_g * jnp.tanh(c_new)
            return (h_new, c_new), h_new

        sa_t = jnp.transpose(sa, (1, 0, 2))               # (T, B, D)
        (_, _), hs = jax.lax.scan(step, (h0, c0), sa_t)
        return jnp.transpose(hs, (1, 0, 2))               # (B, T, H)

    q1s = run_lstm(sa, hidden1[0][0], hidden1[1][0],
                   p["wih1"], p["whh1"], p["bih1"], p["bhh1"])
    q2s = run_lstm(sa, hidden2[0][0], hidden2[1][0],
                   p["wih2"], p["whh2"], p["bih2"], p["bhh2"])

    q1 = jax.nn.relu(q1s @ p["w2"] + p["b2"]) @ p["w3"] + p["b3"]
    q2 = jax.nn.relu(q2s @ p["w5"] + p["b5"]) @ p["w6"] + p["b6"]
    return q1, q2


# ----------------------------------------------------------------------------
# Main
# ----------------------------------------------------------------------------
def make_params(key, L, P, A, F_, H):
    D = F_ + P + A
    shapes = {
        "wl1": (L, H), "bl1": (1, H),
        "wl2": (H, H), "bl2": (1, H),
        "wl3": (H, F_), "bl3": (1, F_),
        "wih1": (D, 4 * H), "whh1": (H, 4 * H), "bih1": (1, 4 * H), "bhh1": (1, 4 * H),
        "wih2": (D, 4 * H), "whh2": (H, 4 * H), "bih2": (1, 4 * H), "bhh2": (1, 4 * H),
        "w2": (H, H), "b2": (1, H),
        "w3": (H, 1), "b3": (1, 1),
        "w5": (H, H), "b5": (1, H),
        "w6": (H, 1), "b6": (1, 1),
    }
    params = {}
    keys = jax.random.split(key, len(shapes))
    for k_rng, (name, shp) in zip(keys, sorted(shapes.items())):
        params[name] = (0.1 * jax.random.normal(k_rng, shp)).astype(jnp.float32)
    return params


if __name__ == "__main__":
    # small shapes consistent with the module's forward
    B, T = 2, 8
    lidar_state_dim = 24
    robot_goal_state_dim = 4
    action_dim = 2
    lidar_feature_dim = 16
    hidden_dim = 32

    root = jax.random.PRNGKey(0)
    kp, kl, kg, ka, kh1, kc1, kh2, kc2 = jax.random.split(root, 8)

    params = make_params(kp, lidar_state_dim, robot_goal_state_dim, action_dim,
                         lidar_feature_dim, hidden_dim)

    lidar_state = jax.random.normal(kl, (B, T, lidar_state_dim), jnp.float32)
    position_robot_state = jax.random.normal(kg, (B, T, robot_goal_state_dim), jnp.float32)
    action = jax.random.normal(ka, (B, T, action_dim), jnp.float32)
    hidden1 = (jax.random.normal(kh1, (1, B, hidden_dim), jnp.float32),
               jax.random.normal(kc1, (1, B, hidden_dim), jnp.float32))
    hidden2 = (jax.random.normal(kh2, (1, B, hidden_dim), jnp.float32),
               jax.random.normal(kc2, (1, B, hidden_dim), jnp.float32))

    q1, q2 = critic_forward(params, lidar_state, position_robot_state, action,
                            hidden1, hidden2)
    q1 = jax.block_until_ready(q1)
    q2 = jax.block_until_ready(q2)

    q1_ref, q2_ref = critic_reference(params, lidar_state, position_robot_state,
                                      action, hidden1, hidden2)

    assert q1.shape == (B, T, 1) and q2.shape == (B, T, 1)
    assert jnp.allclose(q1, q1_ref, atol=2e-3, rtol=2e-3), "q1 mismatch"
    assert jnp.allclose(q2, q2_ref, atol=2e-3, rtol=2e-3), "q2 mismatch"

    print("KERNEL_OK")
</pallas_src>

<mosaic_0001>
module attributes {stable_mosaic.version = 11 : i64} {
  func.func @critic_kernel(%arg0: memref<16x24xf32, #tpu.memory_space<vmem>>, %arg1: memref<16x4xf32, #tpu.memory_space<vmem>>, %arg2: memref<16x2xf32, #tpu.memory_space<vmem>>, %arg3: memref<2x64xf32, #tpu.memory_space<vmem>>, %arg4: memref<2x64xf32, #tpu.memory_space<vmem>>, %arg5: memref<24x32xf32, #tpu.memory_space<vmem>>, %arg6: memref<1x32xf32, #tpu.memory_space<vmem>>, %arg7: memref<32x32xf32, #tpu.memory_space<vmem>>, %arg8: memref<1x32xf32, #tpu.memory_space<vmem>>, %arg9: memref<32x16xf32, #tpu.memory_space<vmem>>, %arg10: memref<1x16xf32, #tpu.memory_space<vmem>>, %arg11: memref<16x256xf32, #tpu.memory_space<vmem>>, %arg12: memref<4x256xf32, #tpu.memory_space<vmem>>, %arg13: memref<2x256xf32, #tpu.memory_space<vmem>>, %arg14: memref<1x256xf32, #tpu.memory_space<vmem>>, %arg15: memref<64x256xf32, #tpu.memory_space<vmem>>, %arg16: memref<64x64xf32, #tpu.memory_space<vmem>>, %arg17: memref<1x64xf32, #tpu.memory_space<vmem>>, %arg18: memref<64x2xf32, #tpu.memory_space<vmem>>, %arg19: memref<1x2xf32, #tpu.memory_space<vmem>>, %arg20: memref<16x2xf32, #tpu.memory_space<vmem>>, %arg21: memref<16x64xf32, #tpu.memory_space<vmem>>) attributes {dimension_semantics = [], scalar_prefetch = 0 : i64, scratch_operands = 1 : i64, tpu.core_type = #tpu.core_type<tc>} {
    %c0 = arith.constant 0 : index
    %c0_0 = arith.constant 0 : index
    %0 = vector.load %arg0[%c0, %c0_0] : memref<16x24xf32, #tpu.memory_space<vmem>>, vector<16x24xf32>
    %c0_1 = arith.constant 0 : index
    %c0_2 = arith.constant 0 : index
    %1 = vector.load %arg5[%c0_1, %c0_2] : memref<24x32xf32, #tpu.memory_space<vmem>>, vector<24x32xf32>
    %cst = arith.constant dense<0.000000e+00> : vector<16x32xf32>
    %2 = tpu.matmul %0, %1, %cst {dimension_numbers = #tpu.dot_dimension_numbers<[1], [0], [0], [1], [0, 0, 1, 1], [], []>} : vector<16x24xf32>, vector<24x32xf32>, vector<16x32xf32> -> vector<16x32xf32>
    %c0_3 = arith.constant 0 : index
    %c0_4 = arith.constant 0 : index
    %3 = vector.load %arg6[%c0_3, %c0_4] : memref<1x32xf32, #tpu.memory_space<vmem>>, vector<1x32xf32>
    %4 = vector.broadcast %3 : vector<1x32xf32> to vector<16x32xf32>
    %5 = arith.addf %2, %4 : vector<16x32xf32>
    %cst_5 = arith.constant 0.000000e+00 : f32
    %6 = vector.broadcast %cst_5 : f32 to vector<16x32xf32>
    %7 = arith.maximumf %5, %6 : vector<16x32xf32>
    %c0_6 = arith.constant 0 : index
    %c0_7 = arith.constant 0 : index
    %8 = vector.load %arg7[%c0_6, %c0_7] : memref<32x32xf32, #tpu.memory_space<vmem>>, vector<32x32xf32>
    %cst_8 = arith.constant dense<0.000000e+00> : vector<16x32xf32>
    %9 = tpu.matmul %7, %8, %cst_8 {dimension_numbers = #tpu.dot_dimension_numbers<[1], [0], [0], [1], [0, 0, 1, 1], [], []>} : vector<16x32xf32>, vector<32x32xf32>, vector<16x32xf32> -> vector<16x32xf32>
    %c0_9 = arith.constant 0 : index
    %c0_10 = arith.constant 0 : index
    %10 = vector.load %arg8[%c0_9, %c0_10] : memref<1x32xf32, #tpu.memory_space<vmem>>, vector<1x32xf32>
    %11 = vector.broadcast %10 : vector<1x32xf32> to vector<16x32xf32>
    %12 = arith.addf %9, %11 : vector<16x32xf32>
    %cst_11 = arith.constant 0.000000e+00 : f32
    %13 = vector.broadcast %cst_11 : f32 to vector<16x32xf32>
    %14 = arith.maximumf %12, %13 : vector<16x32xf32>
    %c0_12 = arith.constant 0 : index
    %c0_13 = arith.constant 0 : index
    %15 = vector.load %arg9[%c0_12, %c0_13] : memref<32x16xf32, #tpu.memory_space<vmem>>, vector<32x16xf32>
    %cst_14 = arith.constant dense<0.000000e+00> : vector<16x16xf32>
    %16 = tpu.matmul %14, %15, %cst_14 {dimension_numbers = #tpu.dot_dimension_numbers<[1], [0], [0], [1], [0, 0, 1, 1], [], []>} : vector<16x32xf32>, vector<32x16xf32>, vector<16x16xf32> -> vector<16x16xf32>
    %c0_15 = arith.constant 0 : index
    %c0_16 = arith.constant 0 : index
    %17 = vector.load %arg10[%c0_15, %c0_16] : memref<1x16xf32, #tpu.memory_space<vmem>>, vector<1x16xf32>
    %18 = vector.broadcast %17 : vector<1x16xf32> to vector<16x16xf32>
    %19 = arith.addf %16, %18 : vector<16x16xf32>
    %c0_17 = arith.constant 0 : index
    %c0_18 = arith.constant 0 : index
    %20 = vector.load %arg11[%c0_17, %c0_18] : memref<16x256xf32, #tpu.memory_space<vmem>>, vector<16x256xf32>
    %cst_19 = arith.constant dense<0.000000e+00> : vector<16x256xf32>
    %21 = tpu.matmul %19, %20, %cst_19 {dimension_numbers = #tpu.dot_dimension_numbers<[1], [0], [0], [1], [0, 0, 1, 1], [], []>} : vector<16x16xf32>, vector<16x256xf32>, vector<16x256xf32> -> vector<16x256xf32>
    %c0_20 = arith.constant 0 : index
    %c0_21 = arith.constant 0 : index
    %22 = vector.load %arg1[%c0_20, %c0_21] : memref<16x4xf32, #tpu.memory_space<vmem>>, vector<16x4xf32>
    %c0_22 = arith.constant 0 : index
    %c0_23 = arith.constant 0 : index
    %23 = vector.load %arg12[%c0_22, %c0_23] : memref<4x256xf32, #tpu.memory_space<vmem>>, vector<4x256xf32>
    %cst_24 = arith.constant dense<0.000000e+00> : vector<16x256xf32>
    %24 = tpu.matmul %22, %23, %cst_24 {dimension_numbers = #tpu.dot_dimension_numbers<[1], [0], [0], [1], [0, 0, 1, 1], [], []>} : vector<16x4xf32>, vector<4x256xf32>, vector<16x256xf32> -> vector<16x256xf32>
    %25 = arith.addf %21, %24 : vector<16x256xf32>
    %c0_25 = arith.constant 0 : index
    %c0_26 = arith.constant 0 : index
    %26 = vector.load %arg2[%c0_25, %c0_26] : memref<16x2xf32, #tpu.memory_space<vmem>>, vector<16x2xf32>
    %c0_27 = arith.constant 0 : index
    %c0_28 = arith.constant 0 : index
    %27 = vector.load %arg13[%c0_27, %c0_28] : memref<2x256xf32, #tpu.memory_space<vmem>>, vector<2x256xf32>
    %cst_29 = arith.constant dense<0.000000e+00> : vector<16x256xf32>
    %28 = tpu.matmul %26, %27, %cst_29 {dimension_numbers = #tpu.dot_dimension_numbers<[1], [0], [0], [1], [0, 0, 1, 1], [], []>} : vector<16x2xf32>, vector<2x256xf32>, vector<16x256xf32> -> vector<16x256xf32>
    %29 = arith.addf %25, %28 : vector<16x256xf32>
    %c0_30 = arith.constant 0 : index
    %c0_31 = arith.constant 0 : index
    %30 = vector.load %arg14[%c0_30, %c0_31] : memref<1x256xf32, #tpu.memory_space<vmem>>, vector<1x256xf32>
    %31 = vector.broadcast %30 : vector<1x256xf32> to vector<16x256xf32>
    %32 = arith.addf %29, %31 : vector<16x256xf32>
    %c0_32 = arith.constant 0 : index
    %c0_33 = arith.constant 0 : index
    %33 = vector.load %arg15[%c0_32, %c0_33] : memref<64x256xf32, #tpu.memory_space<vmem>>, vector<64x256xf32>
    %c0_34 = arith.constant 0 : index
    %c0_35 = arith.constant 0 : index
    %34 = vector.load %arg3[%c0_34, %c0_35] : memref<2x64xf32, #tpu.memory_space<vmem>>, vector<2x64xf32>
    %c0_36 = arith.constant 0 : index
    %c0_37 = arith.constant 0 : index
    %35 = vector.load %arg4[%c0_36, %c0_37] : memref<2x64xf32, #tpu.memory_space<vmem>>, vector<2x64xf32>
    %36 = vector.extract_strided_slice %32 {offsets = [0, 0], sizes = [2, 256], strides = [1, 1]} : vector<16x256xf32> to vector<2x256xf32>
    %cst_38 = arith.constant dense<0.000000e+00> : vector<2x256xf32>
    %37 = tpu.matmul %34, %33, %cst_38 {dimension_numbers = #tpu.dot_dimension_numbers<[1], [0], [0], [1], [0, 0, 1, 1], [], []>} : vector<2x64xf32>, vector<64x256xf32>, vector<2x256xf32> -> vector<2x256xf32>
    %38 = arith.addf %36, %37 : vector<2x256xf32>
    %39 = vector.extract_strided_slice %38 {offsets = [0, 0], sizes = [2, 64], strides = [1, 1]} : vector<2x256xf32> to vector<2x64xf32>
    %40 = arith.negf %39 : vector<2x64xf32>
    %41 = math.exp %40 : vector<2x64xf32>
    %cst_39 = arith.constant 1.000000e+00 : f32
    %42 = vector.broadcast %cst_39 : f32 to vector<2x64xf32>
    %43 = arith.addf %42, %41 : vector<2x64xf32>
    %44 = arith.divf %42, %43 : vector<2x64xf32>
    %45 = vector.extract_strided_slice %38 {offsets = [0, 64], sizes = [2, 64], strides = [1, 1]} : vector<2x256xf32> to vector<2x64xf32>
    %46 = arith.negf %45 : vector<2x64xf32>
    %47 = math.exp %46 : vector<2x64xf32>
    %cst_40 = arith.constant 1.000000e+00 : f32
    %48 = vector.broadcast %cst_40 : f32 to vector<2x64xf32>
    %49 = arith.addf %48, %47 : vector<2x64xf32>
    %50 = arith.divf %48, %49 : vector<2x64xf32>
    %51 = vector.extract_strided_slice %38 {offsets = [0, 128], sizes = [2, 64], strides = [1, 1]} : vector<2x256xf32> to vector<2x64xf32>
    %52 = math.tanh %51 : vector<2x64xf32>
    %53 = vector.extract_strided_slice %38 {offsets = [0, 192], sizes = [2, 64], strides = [1, 1]} : vector<2x256xf32> to vector<2x64xf32>
    %54 = arith.negf %53 : vector<2x64xf32>
    %55 = math.exp %54 : vector<2x64xf32>
    %cst_41 = arith.constant 1.000000e+00 : f32
    %56 = vector.broadcast %cst_41 : f32 to vector<2x64xf32>
    %57 = arith.addf %56, %55 : vector<2x64xf32>
    %58 = arith.divf %56, %57 : vector<2x64xf32>
    %59 = arith.mulf %50, %35 : vector<2x64xf32>
    %60 = arith.mulf %44, %52 : vector<2x64xf32>
    %61 = arith.addf %59, %60 : vector<2x64xf32>
    %62 = math.tanh %61 : vector<2x64xf32>
    %63 = arith.mulf %58, %62 : vector<2x64xf32>
    %c0_42 = arith.constant 0 : index
    %c0_43 = arith.constant 0 : index
    %64 = vector.load %arg21[%c0_42, %c0_43] : memref<16x64xf32, #tpu.memory_space<vmem>>, vector<2x64xf32>
    tpu.vector_store %arg21[%c0_42, %c0_43], %63 {strides = array<i32>} : memref<16x64xf32, #tpu.memory_space<vmem>>, vector<2x64xf32>,
    %65 = vector.extract_strided_slice %32 {offsets = [2, 0], sizes = [2, 256], strides = [1, 1]} : vector<16x256xf32> to vector<2x256xf32>
    %cst_44 = arith.constant dense<0.000000e+00> : vector<2x256xf32>
    %66 = tpu.matmul %63, %33, %cst_44 {dimension_numbers = #tpu.dot_dimension_numbers<[1], [0], [0], [1], [0, 0, 1, 1], [], []>} : vector<2x64xf32>, vector<64x256xf32>, vector<2x256xf32> -> vector<2x256xf32>
    %67 = arith.addf %65, %66 : vector<2x256xf32>
    %68 = vector.extract_strided_slice %67 {offsets = [0, 0], sizes = [2, 64], strides = [1, 1]} : vector<2x256xf32> to vector<2x64xf32>
    %69 = arith.negf %68 : vector<2x64xf32>
    %70 = math.exp %69 : vector<2x64xf32>
    %cst_45 = arith.constant 1.000000e+00 : f32
    %71 = vector.broadcast %cst_45 : f32 to vector<2x64xf32>
    %72 = arith.addf %71, %70 : vector<2x64xf32>
    %73 = arith.divf %71, %72 : vector<2x64xf32>
    %74 = vector.extract_strided_slice %67 {offsets = [0, 64], sizes = [2, 64], strides = [1, 1]} : vector<2x256xf32> to vector<2x64xf32>
    %75 = arith.negf %74 : vector<2x64xf32>
    %76 = math.exp %75 : vector<2x64xf32>
    %cst_46 = arith.constant 1.000000e+00 : f32
    %77 = vector.broadcast %cst_46 : f32 to vector<2x64xf32>
    %78 = arith.addf %77, %76 : vector<2x64xf32>
    %79 = arith.divf %77, %78 : vector<2x64xf32>
    %80 = vector.extract_strided_slice %67 {offsets = [0, 128], sizes = [2, 64], strides = [1, 1]} : vector<2x256xf32> to vector<2x64xf32>
    %81 = math.tanh %80 : vector<2x64xf32>
    %82 = vector.extract_strided_slice %67 {offsets = [0, 192], sizes = [2, 64], strides = [1, 1]} : vector<2x256xf32> to vector<2x64xf32>
    %83 = arith.negf %82 : vector<2x64xf32>
    %84 = math.exp %83 : vector<2x64xf32>
    %cst_47 = arith.constant 1.000000e+00 : f32
    %85 = vector.broadcast %cst_47 : f32 to vector<2x64xf32>
    %86 = arith.addf %85, %84 : vector<2x64xf32>
    %87 = arith.divf %85, %86 : vector<2x64xf32>
    %88 = arith.mulf %79, %61 : vector<2x64xf32>
    %89 = arith.mulf %73, %81 : vector<2x64xf32>
    %90 = arith.addf %88, %89 : vector<2x64xf32>
    %91 = math.tanh %90 : vector<2x64xf32>
    %92 = arith.mulf %87, %91 : vector<2x64xf32>
    %c2 = arith.constant 2 : index
    %c0_48 = arith.constant 0 : index
    %93 = vector.load %arg21[%c2, %c0_48] : memref<16x64xf32, #tpu.memory_space<vmem>>, vector<2x64xf32>
    tpu.vector_store %arg21[%c2, %c0_48], %92 {strides = array<i32>} : memref<16x64xf32, #tpu.memory_space<vmem>>, vector<2x64xf32>,
    %94 = vector.extract_strided_slice %32 {offsets = [4, 0], sizes = [2, 256], strides = [1, 1]} : vector<16x256xf32> to vector<2x256xf32>
    %cst_49 = arith.constant dense<0.000000e+00> : vector<2x256xf32>
    %95 = tpu.matmul %92, %33, %cst_49 {dimension_numbers = #tpu.dot_dimension_numbers<[1], [0], [0], [1], [0, 0, 1, 1], [], []>} : vector<2x64xf32>, vector<64x256xf32>, vector<2x256xf32> -> vector<2x256xf32>
    %96 = arith.addf %94, %95 : vector<2x256xf32>
    %97 = vector.extract_strided_slice %96 {offsets = [0, 0], sizes = [2, 64], strides = [1, 1]} : vector<2x256xf32> to vector<2x64xf32>
    %98 = arith.negf %97 : vector<2x64xf32>
    %99 = math.exp %98 : vector<2x64xf32>
    %cst_50 = arith.constant 1.000000e+00 : f32
    %100 = vector.broadcast %cst_50 : f32 to vector<2x64xf32>
    %101 = arith.addf %100, %99 : vector<2x64xf32>
    %102 = arith.divf %100, %101 : vector<2x64xf32>
    %103 = vector.extract_strided_slice %96 {offsets = [0, 64], sizes = [2, 64], strides = [1, 1]} : vector<2x256xf32> to vector<2x64xf32>
    %104 = arith.negf %103 : vector<2x64xf32>
    %105 = math.exp %104 : vector<2x64xf32>
    %cst_51 = arith.constant 1.000000e+00 : f32
    %106 = vector.broadcast %cst_51 : f32 to vector<2x64xf32>
    %107 = arith.addf %106, %105 : vector<2x64xf32>
    %108 = arith.divf %106, %107 : vector<2x64xf32>
    %109 = vector.extract_strided_slice %96 {offsets = [0, 128], sizes = [2, 64], strides = [1, 1]} : vector<2x256xf32> to vector<2x64xf32>
    %110 = math.tanh %109 : vector<2x64xf32>
    %111 = vector.extract_strided_slice %96 {offsets = [0, 192], sizes = [2, 64], strides = [1, 1]} : vector<2x256xf32> to vector<2x64xf32>
    %112 = arith.negf %111 : vector<2x64xf32>
    %113 = math.exp %112 : vector<2x64xf32>
    %cst_52 = arith.constant 1.000000e+00 : f32
    %114 = vector.broadcast %cst_52 : f32 to vector<2x64xf32>
    %115 = arith.addf %114, %113 : vector<2x64xf32>
    %116 = arith.divf %114, %115 : vector<2x64xf32>
    %117 = arith.mulf %108, %90 : vector<2x64xf32>
    %118 = arith.mulf %102, %110 : vector<2x64xf32>
    %119 = arith.addf %117, %118 : vector<2x64xf32>
    %120 = math.tanh %119 : vector<2x64xf32>
    %121 = arith.mulf %116, %120 : vector<2x64xf32>
    %c4 = arith.constant 4 : index
    %c0_53 = arith.constant 0 : index
    %122 = vector.load %arg21[%c4, %c0_53] : memref<16x64xf32, #tpu.memory_space<vmem>>, vector<2x64xf32>
    tpu.vector_store %arg21[%c4, %c0_53], %121 {strides = array<i32>} : memref<16x64xf32, #tpu.memory_space<vmem>>, vector<2x64xf32>,
    %123 = vector.extract_strided_slice %32 {offsets = [6, 0], sizes = [2, 256], strides = [1, 1]} : vector<16x256xf32> to vector<2x256xf32>
    %cst_54 = arith.constant dense<0.000000e+00> : vector<2x256xf32>
    %124 = tpu.matmul %121, %33, %cst_54 {dimension_numbers = #tpu.dot_dimension_numbers<[1], [0], [0], [1], [0, 0, 1, 1], [], []>} : vector<2x64xf32>, vector<64x256xf32>, vector<2x256xf32> -> vector<2x256xf32>
    %125 = arith.addf %123, %124 : vector<2x256xf32>
    %126 = vector.extract_strided_slice %125 {offsets = [0, 0], sizes = [2, 64], strides = [1, 1]} : vector<2x256xf32> to vector<2x64xf32>
    %127 = arith.negf %126 : vector<2x64xf32>
    %128 = math.exp %127 : vector<2x64xf32>
    %cst_55 = arith.constant 1.000000e+00 : f32
    %129 = vector.broadcast %cst_55 : f32 to vector<2x64xf32>
    %130 = arith.addf %129, %128 : vector<2x64xf32>
    %131 = arith.divf %129, %130 : vector<2x64xf32>
    %132 = vector.extract_strided_slice %125 {offsets = [0, 64], sizes = [2, 64], strides = [1, 1]} : vector<2x256xf32> to vector<2x64xf32>
    %133 = arith.negf %132 : vector<2x64xf32>
    %134 = math.exp %133 : vector<2x64xf32>
    %cst_56 = arith.constant 1.000000e+00 : f32
    %135 = vector.broadcast %cst_56 : f32 to vector<2x64xf32>
    %136 = arith.addf %135, %134 : vector<2x64xf32>
    %137 = arith.divf %135, %136 : vector<2x64xf32>
    %138 = vector.extract_strided_slice %125 {offsets = [0, 128], sizes = [2, 64], strides = [1, 1]} : vector<2x256xf32> to vector<2x64xf32>
    %139 = math.tanh %138 : vector<2x64xf32>
    %140 = vector.extract_strided_slice %125 {offsets = [0, 192], sizes = [2, 64], strides = [1, 1]} : vector<2x256xf32> to vector<2x64xf32>
    %141 = arith.negf %140 : vector<2x64xf32>
    %142 = math.exp %141 : vector<2x64xf32>
    %cst_57 = arith.constant 1.000000e+00 : f32
    %143 = vector.broadcast %cst_57 : f32 to vector<2x64xf32>
    %144 = arith.addf %143, %142 : vector<2x64xf32>
    %145 = arith.divf %143, %144 : vector<2x64xf32>
    %146 = arith.mulf %137, %119 : vector<2x64xf32>
    %147 = arith.mulf %131, %139 : vector<2x64xf32>
    %148 = arith.addf %146, %147 : vector<2x64xf32>
    %149 = math.tanh %148 : vector<2x64xf32>
    %150 = arith.mulf %145, %149 : vector<2x64xf32>
    %c6 = arith.constant 6 : index
    %c0_58 = arith.constant 0 : index
    %151 = vector.load %arg21[%c6, %c0_58] : memref<16x64xf32, #tpu.memory_space<vmem>>, vector<2x64xf32>
    tpu.vector_store %arg21[%c6, %c0_58], %150 {strides = array<i32>} : memref<16x64xf32, #tpu.memory_space<vmem>>, vector<2x64xf32>,
    %152 = vector.extract_strided_slice %32 {offsets = [8, 0], sizes = [2, 256], strides = [1, 1]} : vector<16x256xf32> to vector<2x256xf32>
    %cst_59 = arith.constant dense<0.000000e+00> : vector<2x256xf32>
    %153 = tpu.matmul %150, %33, %cst_59 {dimension_numbers = #tpu.dot_dimension_numbers<[1], [0], [0], [1], [0, 0, 1, 1], [], []>} : vector<2x64xf32>, vector<64x256xf32>, vector<2x256xf32> -> vector<2x256xf32>
    %154 = arith.addf %152, %153 : vector<2x256xf32>
    %155 = vector.extract_strided_slice %154 {offsets = [0, 0], sizes = [2, 64], strides = [1, 1]} : vector<2x256xf32> to vector<2x64xf32>
    %156 = arith.negf %155 : vector<2x64xf32>
    %157 = math.exp %156 : vector<2x64xf32>
    %cst_60 = arith.constant 1.000000e+00 : f32
    %158 = vector.broadcast %cst_60 : f32 to vector<2x64xf32>
    %159 = arith.addf %158, %157 : vector<2x64xf32>
    %160 = arith.divf %158, %159 : vector<2x64xf32>
    %161 = vector.extract_strided_slice %154 {offsets = [0, 64], sizes = [2, 64], strides = [1, 1]} : vector<2x256xf32> to vector<2x64xf32>
    %162 = arith.negf %161 : vector<2x64xf32>
    %163 = math.exp %162 : vector<2x64xf32>
    %cst_61 = arith.constant 1.000000e+00 : f32
    %164 = vector.broadcast %cst_61 : f32 to vector<2x64xf32>
    %165 = arith.addf %164, %163 : vector<2x64xf32>
    %166 = arith.divf %164, %165 : vector<2x64xf32>
    %167 = vector.extract_strided_slice %154 {offsets = [0, 128], sizes = [2, 64], strides = [1, 1]} : vector<2x256xf32> to vector<2x64xf32>
    %168 = math.tanh %167 : vector<2x64xf32>
    %169 = vector.extract_strided_slice %154 {offsets = [0, 192], sizes = [2, 64], strides = [1, 1]} : vector<2x256xf32> to vector<2x64xf32>
    %170 = arith.negf %169 : vector<2x64xf32>
    %171 = math.exp %170 : vector<2x64xf32>
    %cst_62 = arith.constant 1.000000e+00 : f32
    %172 = vector.broadcast %cst_62 : f32 to vector<2x64xf32>
    %173 = arith.addf %172, %171 : vector<2x64xf32>
    %174 = arith.divf %172, %173 : vector<2x64xf32>
    %175 = arith.mulf %166, %148 : vector<2x64xf32>
    %176 = arith.mulf %160, %168 : vector<2x64xf32>
    %177 = arith.addf %175, %176 : vector<2x64xf32>
    %178 = math.tanh %177 : vector<2x64xf32>
    %179 = arith.mulf %174, %178 : vector<2x64xf32>
    %c8 = arith.constant 8 : index
    %c0_63 = arith.constant 0 : index
    %180 = vector.load %arg21[%c8, %c0_63] : memref<16x64xf32, #tpu.memory_space<vmem>>, vector<2x64xf32>
    tpu.vector_store %arg21[%c8, %c0_63], %179 {strides = array<i32>} : memref<16x64xf32, #tpu.memory_space<vmem>>, vector<2x64xf32>,
    %181 = vector.extract_strided_slice %32 {offsets = [10, 0], sizes = [2, 256], strides = [1, 1]} : vector<16x256xf32> to vector<2x256xf32>
    %cst_64 = arith.constant dense<0.000000e+00> : vector<2x256xf32>
    %182 = tpu.matmul %179, %33, %cst_64 {dimension_numbers = #tpu.dot_dimension_numbers<[1], [0], [0], [1], [0, 0, 1, 1], [], []>} : vector<2x64xf32>, vector<64x256xf32>, vector<2x256xf32> -> vector<2x256xf32>
    %183 = arith.addf %181, %182 : vector<2x256xf32>
    %184 = vector.extract_strided_slice %183 {offsets = [0, 0], sizes = [2, 64], strides = [1, 1]} : vector<2x256xf32> to vector<2x64xf32>
    %185 = arith.negf %184 : vector<2x64xf32>
    %186 = math.exp %185 : vector<2x64xf32>
    %cst_65 = arith.constant 1.000000e+00 : f32
    %187 = vector.broadcast %cst_65 : f32 to vector<2x64xf32>
    %188 = arith.addf %187, %186 : vector<2x64xf32>
    %189 = arith.divf %187, %188 : vector<2x64xf32>
    %190 = vector.extract_strided_slice %183 {offsets = [0, 64], sizes = [2, 64], strides = [1, 1]} : vector<2x256xf32> to vector<2x64xf32>
    %191 = arith.negf %190 : vector<2x64xf32>
    %192 = math.exp %191 : vector<2x64xf32>
    %cst_66 = arith.constant 1.000000e+00 : f32
    %193 = vector.broadcast %cst_66 : f32 to vector<2x64xf32>
    %194 = arith.addf %193, %192 : vector<2x64xf32>
    %195 = arith.divf %193, %194 : vector<2x64xf32>
    %196 = vector.extract_strided_slice %183 {offsets = [0, 128], sizes = [2, 64], strides = [1, 1]} : vector<2x256xf32> to vector<2x64xf32>
    %197 = math.tanh %196 : vector<2x64xf32>
    %198 = vector.extract_strided_slice %183 {offsets = [0, 192], sizes = [2, 64], strides = [1, 1]} : vector<2x256xf32> to vector<2x64xf32>
    %199 = arith.negf %198 : vector<2x64xf32>
    %200 = math.exp %199 : vector<2x64xf32>
    %cst_67 = arith.constant 1.000000e+00 : f32
    %201 = vector.broadcast %cst_67 : f32 to vector<2x64xf32>
    %202 = arith.addf %201, %200 : vector<2x64xf32>
    %203 = arith.divf %201, %202 : vector<2x64xf32>
    %204 = arith.mulf %195, %177 : vector<2x64xf32>
    %205 = arith.mulf %189, %197 : vector<2x64xf32>
    %206 = arith.addf %204, %205 : vector<2x64xf32>
    %207 = math.tanh %206 : vector<2x64xf32>
    %208 = arith.mulf %203, %207 : vector<2x64xf32>
    %c10 = arith.constant 10 : index
    %c0_68 = arith.constant 0 : index
    %209 = vector.load %arg21[%c10, %c0_68] : memref<16x64xf32, #tpu.memory_space<vmem>>, vector<2x64xf32>
    tpu.vector_store %arg21[%c10, %c0_68], %208 {strides = array<i32>} : memref<16x64xf32, #tpu.memory_space<vmem>>, vector<2x64xf32>,
    %210 = vector.extract_strided_slice %32 {offsets = [12, 0], sizes = [2, 256], strides = [1, 1]} : vector<16x256xf32> to vector<2x256xf32>
    %cst_69 = arith.constant dense<0.000000e+00> : vector<2x256xf32>
    %211 = tpu.matmul %208, %33, %cst_69 {dimension_numbers = #tpu.dot_dimension_numbers<[1], [0], [0], [1], [0, 0, 1, 1], [], []>} : vector<2x64xf32>, vector<64x256xf32>, vector<2x256xf32> -> vector<2x256xf32>
    %212 = arith.addf %210, %211 : vector<2x256xf32>
    %213 = vector.extract_strided_slice %212 {offsets = [0, 0], sizes = [2, 64], strides = [1, 1]} : vector<2x256xf32> to vector<2x64xf32>
    %214 = arith.negf %213 : vector<2x64xf32>
    %215 = math.exp %214 : vector<2x64xf32>
    %cst_70 = arith.constant 1.000000e+00 : f32
    %216 = vector.broadcast %cst_70 : f32 to vector<2x64xf32>
    %217 = arith.addf %216, %215 : vector<2x64xf32>
    %218 = arith.divf %216, %217 : vector<2x64xf32>
    %219 = vector.extract_strided_slice %212 {offsets = [0, 64], sizes = [2, 64], strides = [1, 1]} : vector<2x256xf32> to vector<2x64xf32>
    %220 = arith.negf %219 : vector<2x64xf32>
    %221 = math.exp %220 : vector<2x64xf32>
    %cst_71 = arith.constant 1.000000e+00 : f32
    %222 = vector.broadcast %cst_71 : f32 to vector<2x64xf32>
    %223 = arith.addf %222, %221 : vector<2x64xf32>
    %224 = arith.divf %222, %223 : vector<2x64xf32>
    %225 = vector.extract_strided_slice %212 {offsets = [0, 128], sizes = [2, 64], strides = [1, 1]} : vector<2x256xf32> to vector<2x64xf32>
    %226 = math.tanh %225 : vector<2x64xf32>
    %227 = vector.extract_strided_slice %212 {offsets = [0, 192], sizes = [2, 64], strides = [1, 1]} : vector<2x256xf32> to vector<2x64xf32>
    %228 = arith.negf %227 : vector<2x64xf32>
    %229 = math.exp %228 : vector<2x64xf32>
    %cst_72 = arith.constant 1.000000e+00 : f32
    %230 = vector.broadcast %cst_72 : f32 to vector<2x64xf32>
    %231 = arith.addf %230, %229 : vector<2x64xf32>
    %232 = arith.divf %230, %231 : vector<2x64xf32>
    %233 = arith.mulf %224, %206 : vector<2x64xf32>
    %234 = arith.mulf %218, %226 : vector<2x64xf32>
    %235 = arith.addf %233, %234 : vector<2x64xf32>
    %236 = math.tanh %235 : vector<2x64xf32>
    %237 = arith.mulf %232, %236 : vector<2x64xf32>
    %c12 = arith.constant 12 : index
    %c0_73 = arith.constant 0 : index
    %238 = vector.load %arg21[%c12, %c0_73] : memref<16x64xf32, #tpu.memory_space<vmem>>, vector<2x64xf32>
    tpu.vector_store %arg21[%c12, %c0_73], %237 {strides = array<i32>} : memref<16x64xf32, #tpu.memory_space<vmem>>, vector<2x64xf32>,
    %239 = vector.extract_strided_slice %32 {offsets = [14, 0], sizes = [2, 256], strides = [1, 1]} : vector<16x256xf32> to vector<2x256xf32>
    %cst_74 = arith.constant dense<0.000000e+00> : vector<2x256xf32>
    %240 = tpu.matmul %237, %33, %cst_74 {dimension_numbers = #tpu.dot_dimension_numbers<[1], [0], [0], [1], [0, 0, 1, 1], [], []>} : vector<2x64xf32>, vector<64x256xf32>, vector<2x256xf32> -> vector<2x256xf32>
    %241 = arith.addf %239, %240 : vector<2x256xf32>
    %242 = vector.extract_strided_slice %241 {offsets = [0, 0], sizes = [2, 64], strides = [1, 1]} : vector<2x256xf32> to vector<2x64xf32>
    %243 = arith.negf %242 : vector<2x64xf32>
    %244 = math.exp %243 : vector<2x64xf32>
    %cst_75 = arith.constant 1.000000e+00 : f32
    %245 = vector.broadcast %cst_75 : f32 to vector<2x64xf32>
    %246 = arith.addf %245, %244 : vector<2x64xf32>
    %247 = arith.divf %245, %246 : vector<2x64xf32>
    %248 = vector.extract_strided_slice %241 {offsets = [0, 64], sizes = [2, 64], strides = [1, 1]} : vector<2x256xf32> to vector<2x64xf32>
    %249 = arith.negf %248 : vector<2x64xf32>
    %250 = math.exp %249 : vector<2x64xf32>
    %cst_76 = arith.constant 1.000000e+00 : f32
    %251 = vector.broadcast %cst_76 : f32 to vector<2x64xf32>
    %252 = arith.addf %251, %250 : vector<2x64xf32>
    %253 = arith.divf %251, %252 : vector<2x64xf32>
    %254 = vector.extract_strided_slice %241 {offsets = [0, 128], sizes = [2, 64], strides = [1, 1]} : vector<2x256xf32> to vector<2x64xf32>
    %255 = math.tanh %254 : vector<2x64xf32>
    %256 = vector.extract_strided_slice %241 {offsets = [0, 192], sizes = [2, 64], strides = [1, 1]} : vector<2x256xf32> to vector<2x64xf32>
    %257 = arith.negf %256 : vector<2x64xf32>
    %258 = math.exp %257 : vector<2x64xf32>
    %cst_77 = arith.constant 1.000000e+00 : f32
    %259 = vector.broadcast %cst_77 : f32 to vector<2x64xf32>
    %260 = arith.addf %259, %258 : vector<2x64xf32>
    %261 = arith.divf %259, %260 : vector<2x64xf32>
    %262 = arith.mulf %253, %235 : vector<2x64xf32>
    %263 = arith.mulf %247, %255 : vector<2x64xf32>
    %264 = arith.addf %262, %263 : vector<2x64xf32>
    %265 = math.tanh %264 : vector<2x64xf32>
    %266 = arith.mulf %261, %265 : vector<2x64xf32>
    %c14 = arith.constant 14 : index
    %c0_78 = arith.constant 0 : index
    %267 = vector.load %arg21[%c14, %c0_78] : memref<16x64xf32, #tpu.memory_space<vmem>>, vector<2x64xf32>
    tpu.vector_store %arg21[%c14, %c0_78], %266 {strides = array<i32>} : memref<16x64xf32, #tpu.memory_space<vmem>>, vector<2x64xf32>,
    %c0_79 = arith.constant 0 : index
    %c0_80 = arith.constant 0 : index
    %268 = vector.load %arg21[%c0_79, %c0_80] : memref<16x64xf32, #tpu.memory_space<vmem>>, vector<16x64xf32>
    %c0_81 = arith.constant 0 : index
    %c0_82 = arith.constant 0 : index
    %269 = vector.load %arg16[%c0_81, %c0_82] : memref<64x64xf32, #tpu.memory_space<vmem>>, vector<64x64xf32>
    %cst_83 = arith.constant dense<0.000000e+00> : vector<16x64xf32>
    %270 = tpu.matmul %268, %269, %cst_83 {dimension_numbers = #tpu.dot_dimension_numbers<[1], [0], [0], [1], [0, 0, 1, 1], [], []>} : vector<16x64xf32>, vector<64x64xf32>, vector<16x64xf32> -> vector<16x64xf32>
    %c0_84 = arith.constant 0 : index
    %c0_85 = arith.constant 0 : index
    %271 = vector.load %arg17[%c0_84, %c0_85] : memref<1x64xf32, #tpu.memory_space<vmem>>, vector<1x64xf32>
    %272 = vector.broadcast %271 : vector<1x64xf32> to vector<16x64xf32>
    %273 = arith.addf %270, %272 : vector<16x64xf32>
    %cst_86 = arith.constant 0.000000e+00 : f32
    %274 = vector.broadcast %cst_86 : f32 to vector<16x64xf32>
    %275 = arith.maximumf %273, %274 : vector<16x64xf32>
    %c0_87 = arith.constant 0 : index
    %c0_88 = arith.constant 0 : index
    %276 = vector.load %arg18[%c0_87, %c0_88] : memref<64x2xf32, #tpu.memory_space<vmem>>, vector<64x2xf32>
    %cst_89 = arith.constant dense<0.000000e+00> : vector<16x2xf32>
    %277 = tpu.matmul %275, %276, %cst_89 {dimension_numbers = #tpu.dot_dimension_numbers<[1], [0], [0], [1], [0, 0, 1, 1], [], []>} : vector<16x64xf32>, vector<64x2xf32>, vector<16x2xf32> -> vector<16x2xf32>
    %c0_90 = arith.constant 0 : index
    %c0_91 = arith.constant 0 : index
    %278 = vector.load %arg19[%c0_90, %c0_91] : memref<1x2xf32, #tpu.memory_space<vmem>>, vector<1x2xf32>
    %279 = vector.broadcast %278 : vector<1x2xf32> to vector<16x2xf32>
    %280 = arith.addf %277, %279 : vector<16x2xf32>
    %c0_92 = arith.constant 0 : index
    %c0_93 = arith.constant 0 : index
    %281 = vector.load %arg20[%c0_92, %c0_93] : memref<16x2xf32, #tpu.memory_space<vmem>>, vector<16x2xf32>
    tpu.vector_store %arg20[%c0_92, %c0_93], %280 {strides = array<i32>} : memref<16x2xf32, #tpu.memory_space<vmem>>, vector<16x2xf32>,
    return
  }
}

</mosaic_0001>

<llo_original>
// kernel: tpu_custom_call.1
$region0: #{tpu_custom_call.1}
  #allocation0 [shape = 'u32[]', space=smem, size = 0x4, offset = 0x4, fixed_abs, tag = 'smem constant byte address 0x4 - core index']
  #allocation1 [shape = 'u32[72,128]{1,0:T(1,128)}', space=vmem, size = 0x9000, scoped, tag = 'internal scratch']
  #allocation2 [shape = 'f32[16,64]{1,0:T(8,128)}', space=vmem, size = 0x2000, scoped, tag = 'scratch operand']
  %s0 = inlined_call_operand.hbm [shape: f32[16,24], index: 0, kind: input, shape index: {}]
  %s1 = inlined_call_operand.vmem [shape: f32[16,4], index: 1, kind: input, shape index: {}]
  %s2 = inlined_call_operand.vmem [shape: f32[16,2], index: 2, kind: input, shape index: {}]
  %s3 = inlined_call_operand.vmem [shape: f32[2,64], index: 3, kind: input, shape index: {}]
  %s4 = inlined_call_operand.hbm [shape: f32[2,64], index: 4, kind: input, shape index: {}]
  %s5 = inlined_call_operand.hbm [shape: f32[24,32], index: 5, kind: input, shape index: {}]
  %s6 = inlined_call_operand.vmem [shape: f32[1,32], index: 6, kind: input, shape index: {}]
  %s7 = inlined_call_operand.vmem [shape: f32[32,32], index: 7, kind: input, shape index: {}]
  %s8 = inlined_call_operand.hbm [shape: f32[1,32], index: 8, kind: input, shape index: {}]
  %s9 = inlined_call_operand.vmem [shape: f32[32,16], index: 9, kind: input, shape index: {}]
  %s10 = inlined_call_operand.hbm [shape: f32[1,16], index: 10, kind: input, shape index: {}]
  %s11 = inlined_call_operand.vmem [shape: f32[16,256], index: 11, kind: input, shape index: {}]
  %s12 = inlined_call_operand.vmem [shape: f32[4,256], index: 12, kind: input, shape index: {}]
  %s13 = inlined_call_operand.vmem [shape: f32[2,256], index: 13, kind: input, shape index: {}]
  %s14 = inlined_call_operand.vmem [shape: f32[1,256], index: 14, kind: input, shape index: {}]
  %s15 = inlined_call_operand.hbm [shape: f32[64,256], index: 15, kind: input, shape index: {}]
  %s16 = inlined_call_operand.vmem [shape: f32[64,64], index: 16, kind: input, shape index: {}]
  %s17 = inlined_call_operand.vmem [shape: f32[1,64], index: 17, kind: input, shape index: {}]
  %s18 = inlined_call_operand.vmem [shape: f32[64,2], index: 18, kind: input, shape index: {}]
  %s19 = inlined_call_operand.vmem [shape: f32[1,2], index: 19, kind: input, shape index: {}]
  %s20 = inlined_call_operand.vmem [shape: f32[16,2], index: 20, kind: output, shape index: {}]
  %s21 = sld [smem:[#allocation0]]
  $region114: #{tpu_custom_call.1} parent=0
    _
  %s23 = ssub.s32 1, %s21
  %s24 = scalar_select 0, %s23, %s21
  $region1: #{tpu_custom_call.1} parent=0
    #allocation3 [shape = 'u8[8192]{0}', space=vmem, size = 0x2000, scoped, tag = 'input window, operand 0, single buffered']
    #allocation4 [shape = 's32[1]{0}', space=sflag, size = 0x4, scoped, tag = 'scoped memory for tpu_custom_call.1']
    #allocation5 [shape = 'u8[1024]{0}', space=vmem, size = 0x400, scoped, tag = 'input window, operand 4, single buffered']
    #allocation6 [shape = 's32[1]{0}', space=sflag, size = 0x4, scoped, tag = 'scoped memory for tpu_custom_call.1']
    #allocation7 [shape = 'u8[12288]{0}', space=vmem, size = 0x3000, scoped, tag = 'input window, operand 5, single buffered']
    #allocation8 [shape = 'u8[512]{0}', space=vmem, size = 0x400, scoped, tag = 'input window, operand 8, single buffered']
    #allocation9 [shape = 's32[1]{0}', space=sflag, size = 0x4, scoped, tag = 'scoped memory for tpu_custom_call.1']
    #allocation10 [shape = 'u8[512]{0}', space=vmem, size = 0x400, scoped, tag = 'input window, operand 10, single buffered']
    #allocation11 [shape = 'u8[65536]{0}', space=vmem, size = 0x10000, scoped, tag = 'input window, operand 15, single buffered']
    #allocation12 [shape = 's32[1]{0}', space=sflag, size = 0x4, scoped, tag = 'scoped memory for tpu_custom_call.1']
    %25 = vsyncpa [#allocation4], 0
    %26 = vsyncpa [#allocation6], 0
    %27 = vsyncpa [#allocation9], 0
    %28 = vsyncpa [#allocation12], 0
    // Predicated region
    $region2: #{tpu_custom_call.1} parent=1 // pred_check
      _
    $region3: #{tpu_custom_call.1} parent=1 // pred_check_branch
      %30 = sbr.rel (0) target = $region5
    $region4: #{tpu_custom_call.1} parent=1 // pred_region
      %32 = vsyncadd [#allocation4], 0
      %s33 = sshll.u32 %s0, 4
      %s34 = int_to_ptr.hbm [resolvable:$true] %s33
      %s35 = sshll.u32 [#allocation3], 4
      %s36 = int_to_ptr.vmem [resolvable:$true] %s35
      %41 = dma.hbm_to_vmem [thread:$0]  %s34, 256, %s36, [#allocation4], 128, 128, 8
    $region5: #{tpu_custom_call.1} parent=1 // pred_fallthru
      _
    // Predicated region
    $region6: #{tpu_custom_call.1} parent=1 // pred_check
      _
    $region7: #{tpu_custom_call.1} parent=1 // pred_check_branch
      %43 = sbr.rel (0) target = $region9
    $region8: #{tpu_custom_call.1} parent=1 // pred_region
      _
    $region9: #{tpu_custom_call.1} parent=1 // pred_fallthru
      _
    // Predicated region
    $region10: #{tpu_custom_call.1} parent=1 // pred_check
      _
    $region11: #{tpu_custom_call.1} parent=1 // pred_check_branch
      %45 = sbr.rel (0) target = $region13
    $region12: #{tpu_custom_call.1} parent=1 // pred_region
      _
    $region13: #{tpu_custom_call.1} parent=1 // pred_fallthru
      _
    // Predicated region
    $region14: #{tpu_custom_call.1} parent=1 // pred_check
      _
    $region15: #{tpu_custom_call.1} parent=1 // pred_check_branch
      %47 = sbr.rel (0) target = $region17
    $region16: #{tpu_custom_call.1} parent=1 // pred_region
      _
    $region17: #{tpu_custom_call.1} parent=1 // pred_fallthru
      _
    // Predicated region
    $region18: #{tpu_custom_call.1} parent=1 // pred_check
      _
    $region19: #{tpu_custom_call.1} parent=1 // pred_check_branch
      %49 = sbr.rel (0) target = $region21
    $region20: #{tpu_custom_call.1} parent=1 // pred_region
      %51 = vsyncadd [#allocation6], 0
      %s53 = sshll.u32 %s4, 4
      %s54 = int_to_ptr.hbm [resolvable:$true] %s53
      %s55 = sshll.u32 [#allocation5], 4
      %s56 = int_to_ptr.vmem [resolvable:$true] %s55
      %58 = dma.hbm_to_vmem [thread:$0]  %s54, 32, %s56, [#allocation6]
    $region21: #{tpu_custom_call.1} parent=1 // pred_fallthru
      _
    // Predicated region
    $region22: #{tpu_custom_call.1} parent=1 // pred_check
      _
    $region23: #{tpu_custom_call.1} parent=1 // pred_check_branch
      %60 = sbr.rel (0) target = $region25
    $region24: #{tpu_custom_call.1} parent=1 // pred_region
      %62 = vsyncadd [#allocation6], 0
      %s63 = sshll.u32 %s5, 4
      %s64 = int_to_ptr.hbm [resolvable:$true] %s63
      %s65 = sshll.u32 [#allocation7], 4
      %s66 = int_to_ptr.vmem [resolvable:$true] %s65
      %71 = dma.hbm_to_vmem [thread:$0]  %s64, 384, %s66, [#allocation6], 128, 128, 8
    $region25: #{tpu_custom_call.1} parent=1 // pred_fallthru
      _
    // Predicated region
    $region26: #{tpu_custom_call.1} parent=1 // pred_check
      _
    $region27: #{tpu_custom_call.1} parent=1 // pred_check_branch
      %73 = sbr.rel (0) target = $region29
    $region28: #{tpu_custom_call.1} parent=1 // pred_region
      _
    $region29: #{tpu_custom_call.1} parent=1 // pred_fallthru
      _
    // Predicated region
    $region30: #{tpu_custom_call.1} parent=1 // pred_check
      _
    $region31: #{tpu_custom_call.1} parent=1 // pred_check_branch
      %75 = sbr.rel (0) target = $region33
    $region32: #{tpu_custom_call.1} parent=1 // pred_region
      _
    $region33: #{tpu_custom_call.1} parent=1 // pred_fallthru
      _
    // Predicated region
    $region34: #{tpu_custom_call.1} parent=1 // pred_check
      _
    $region35: #{tpu_custom_call.1} parent=1 // pred_check_branch
      %77 = sbr.rel (0) target = $region37
    $region36: #{tpu_custom_call.1} parent=1 // pred_region
      %79 = vsyncadd [#allocation9], 0
      %s81 = sshll.u32 %s8, 4
      %s82 = int_to_ptr.hbm [resolvable:$true] %s81
      %s83 = sshll.u32 [#allocation8], 4
      %s84 = int_to_ptr.vmem [resolvable:$true] %s83
      %86 = dma.hbm_to_vmem [thread:$0]  %s82, 16, %s84, [#allocation9]
    $region37: #{tpu_custom_call.1} parent=1 // pred_fallthru
      _
    // Predicated region
    $region38: #{tpu_custom_call.1} parent=1 // pred_check
      _
    $region39: #{tpu_custom_call.1} parent=1 // pred_check_branch
      %88 = sbr.rel (0) target = $region41
    $region40: #{tpu_custom_call.1} parent=1 // pred_region
      _
    $region41: #{tpu_custom_call.1} parent=1 // pred_fallthru
      _
    // Predicated region
    $region42: #{tpu_custom_call.1} parent=1 // pred_check
      _
    $region43: #{tpu_custom_call.1} parent=1 // pred_check_branch
      %90 = sbr.rel (0) target = $region45
    $region44: #{tpu_custom_call.1} parent=1 // pred_region
      %92 = vsyncadd [#allocation9], 0
      %s94 = sshll.u32 %s10, 4
      %s95 = int_to_ptr.hbm [resolvable:$true] %s94
      %s96 = sshll.u32 [#allocation10], 4
      %s97 = int_to_ptr.vmem [resolvable:$true] %s96
      %99 = dma.hbm_to_vmem [thread:$0]  %s95, 16, %s97, [#allocation9]
    $region45: #{tpu_custom_call.1} parent=1 // pred_fallthru
      _
    // Predicated region
    $region46: #{tpu_custom_call.1} parent=1 // pred_check
      _
    $region47: #{tpu_custom_call.1} parent=1 // pred_check_branch
      %101 = sbr.rel (0) target = $region49
    $region48: #{tpu_custom_call.1} parent=1 // pred_region
      _
    $region49: #{tpu_custom_call.1} parent=1 // pred_fallthru
      _
    // Predicated region
    $region50: #{tpu_custom_call.1} parent=1 // pred_check
      _
    $region51: #{tpu_custom_call.1} parent=1 // pred_check_branch
      %103 = sbr.rel (0) target = $region53
    $region52: #{tpu_custom_call.1} parent=1 // pred_region
      _
    $region53: #{tpu_custom_call.1} parent=1 // pred_fallthru
      _
    // Predicated region
    $region54: #{tpu_custom_call.1} parent=1 // pred_check
      _
    $region55: #{tpu_custom_call.1} parent=1 // pred_check_branch
      %105 = sbr.rel (0) target = $region57
    $region56: #{tpu_custom_call.1} parent=1 // pred_region
      _
    $region57: #{tpu_custom_call.1} parent=1 // pred_fallthru
      _
    // Predicated region
    $region58: #{tpu_custom_call.1} parent=1 // pred_check
      _
    $region59: #{tpu_custom_call.1} parent=1 // pred_check_branch
      %107 = sbr.rel (0) target = $region61
    $region60: #{tpu_custom_call.1} parent=1 // pred_region
      _
    $region61: #{tpu_custom_call.1} parent=1 // pred_fallthru
      _
    // Predicated region
    $region62: #{tpu_custom_call.1} parent=1 // pred_check
      _
    $region63: #{tpu_custom_call.1} parent=1 // pred_check_branch
      %109 = sbr.rel (0) target = $region65
    $region64: #{tpu_custom_call.1} parent=1 // pred_region
      %111 = vsyncadd [#allocation12], 0
      %s112 = sshll.u32 %s15, 4
      %s113 = int_to_ptr.hbm [resolvable:$true] %s112
      %s114 = sshll.u32 [#allocation11], 4
      %s115 = int_to_ptr.vmem [resolvable:$true] %s114
      %120 = dma.hbm_to_vmem [thread:$0]  %s113, 2048, %s115, [#allocation12], 256, 256, 16
    $region65: #{tpu_custom_call.1} parent=1 // pred_fallthru
      _
    // Predicated region
    $region66: #{tpu_custom_call.1} parent=1 // pred_check
      _
    $region67: #{tpu_custom_call.1} parent=1 // pred_check_branch
      %122 = sbr.rel (0) target = $region69
    $region68: #{tpu_custom_call.1} parent=1 // pred_region
      _
    $region69: #{tpu_custom_call.1} parent=1 // pred_fallthru
      _
    // Predicated region
    $region70: #{tpu_custom_call.1} parent=1 // pred_check
      _
    $region71: #{tpu_custom_call.1} parent=1 // pred_check_branch
      %124 = sbr.rel (0) target = $region73
    $region72: #{tpu_custom_call.1} parent=1 // pred_region
      _
    $region73: #{tpu_custom_call.1} parent=1 // pred_fallthru
      _
    // Predicated region
    $region74: #{tpu_custom_call.1} parent=1 // pred_check
      _
    $region75: #{tpu_custom_call.1} parent=1 // pred_check_branch
      %126 = sbr.rel (0) target = $region77
    $region76: #{tpu_custom_call.1} parent=1 // pred_region
      _
    $region77: #{tpu_custom_call.1} parent=1 // pred_fallthru
      _
    // Predicated region
    $region78: #{tpu_custom_call.1} parent=1 // pred_check
      _
    $region79: #{tpu_custom_call.1} parent=1 // pred_check_branch
      %128 = sbr.rel (0) target = $region81
    $region80: #{tpu_custom_call.1} parent=1 // pred_region
      _
    $region81: #{tpu_custom_call.1} parent=1 // pred_fallthru
      _
    // Predicated region
    $region82: #{tpu_custom_call.1} parent=1 // pred_check
      _
    $region83: #{tpu_custom_call.1} parent=1 // pred_check_branch
      %130 = sbr.rel (0) target = $region85
    $region84: #{tpu_custom_call.1} parent=1 // pred_region
      %132 = dma.done [#allocation4], 256
    $region85: #{tpu_custom_call.1} parent=1 // pred_fallthru
      _
    // Predicated region
    $region86: #{tpu_custom_call.1} parent=1 // pred_check
      _
    $region87: #{tpu_custom_call.1} parent=1 // pred_check_branch
      %134 = sbr.rel (0) target = $region89
    $region88: #{tpu_custom_call.1} parent=1 // pred_region
      %136 = dma.done [#allocation6], 32
    $region89: #{tpu_custom_call.1} parent=1 // pred_fallthru
      _
    // Predicated region
    $region90: #{tpu_custom_call.1} parent=1 // pred_check
      _
    $region91: #{tpu_custom_call.1} parent=1 // pred_check_branch
      %138 = sbr.rel (0) target = $region93
    $region92: #{tpu_custom_call.1} parent=1 // pred_region
      %140 = dma.done [#allocation6], 384
    $region93: #{tpu_custom_call.1} parent=1 // pred_fallthru
      _
    // Predicated region
    $region94: #{tpu_custom_call.1} parent=1 // pred_check
      _
    $region95: #{tpu_custom_call.1} parent=1 // pred_check_branch
      %142 = sbr.rel (0) target = $region97
    $region96: #{tpu_custom_call.1} parent=1 // pred_region
      %144 = dma.done [#allocation9], 16
    $region97: #{tpu_custom_call.1} parent=1 // pred_fallthru
      _
    // Predicated region
    $region98: #{tpu_custom_call.1} parent=1 // pred_check
      _
    $region99: #{tpu_custom_call.1} parent=1 // pred_check_branch
      %146 = sbr.rel (0) target = $region101
    $region100: #{tpu_custom_call.1} parent=1 // pred_region
      %148 = dma.done [#allocation9], 16
    $region101: #{tpu_custom_call.1} parent=1 // pred_fallthru
      _
    // Predicated region
    $region102: #{tpu_custom_call.1} parent=1 // pred_check
      _
    $region103: #{tpu_custom_call.1} parent=1 // pred_check_branch
      %150 = sbr.rel (0) target = $region105
    $region104: #{tpu_custom_call.1} parent=1 // pred_region
      %152 = dma.done [#allocation12], 2048
    $region105: #{tpu_custom_call.1} parent=1 // pred_fallthru
      _
    %v153 = vld [vmem:[#allocation3] sm:$0xff]
    %v154 = vld [vmem:[#allocation3 + $0x8] sm:$0xff]
    %v155 = vld [vmem:[#allocation7] sm:$0xff]
    %v156 = vld [vmem:[#allocation7 + $0x8] sm:$0xff]
    %v157 = vld [vmem:[#allocation7 + $0x10] sm:$0xff]
    %v158 = vld [vmem:[%s6] sm:$0x1]
    %v160 = vperm.slane %v158, 0
    %vm162 = vcmask 195584
    %v164 = vsel %vm162, %v153, 0
    %v167 = vsel %vm162, %v154, 0
    %169 = vmatpush.msra.mxu0 0.0
    %170 = vmatpush.msra.mxu0 0.0
    %171 = vmatpush.msra.mxu0 0.0
    %172 = vmatpush.msra.mxu0 0.0
    %173 = vmatpush.msra.mxu0 0.0
    %174 = vmatpush.msra.mxu0 0.0
    %175 = vmatpush.msra.mxu0 0.0
    %176 = vmatpush.msra.mxu0 0.0
    %177 = vmatpush.msra.mxu0 0.0
    %178 = vmatpush.msra.mxu0 0.0
    %179 = vmatpush.msra.mxu0 0.0
    %180 = vmatpush.msra.mxu0 0.0
    %181 = vmatpush.msra.mxu0 0.0
    %182 = vmatpush.msra.mxu0 %v157
    %183 = vmatpush.msra.mxu0 %v156
    %184 = vmatpush.msra.mxu0 %v155
    %185 = vmatmul.f32.gmra.mxu0 %v164
    %v186 = vpop.f32.mrf.mxu0
    %v187 = vadd.f32 %v160, %v186
    %188 = vmatmul.f32.gmra.mxu0 %v167
    %v189 = vpop.f32.mrf.mxu0
    %v190 = vadd.f32 %v160, %v189
    %191 = vdwg.mxu0
    %v192 = vmax.f32 %v187, 0.0
    %v193 = vmax.f32 %v190, 0.0
    %v194 = vld [vmem:[%s7] sm:$0xff]
    %v195 = vld [vmem:[%s7 + $0x8] sm:$0xff]
    %v196 = vld [vmem:[%s7 + $0x10] sm:$0xff]
    %v197 = vld [vmem:[%s7 + $0x18] sm:$0xff]
    %v198 = vld [vmem:[#allocation8] sm:$0x1]
    %v200 = vperm.slane %v198, 0
    %vm202 = vcmask 261120
    %v204 = vsel %vm202, %v192, 0
    %v207 = vsel %vm202, %v193, 0
    %209 = vmatpush.msra.mxu0 0.0
    %210 = vmatpush.msra.mxu0 0.0
    %211 = vmatpush.msra.mxu0 0.0
    %212 = vmatpush.msra.mxu0 0.0
    %213 = vmatpush.msra.mxu0 0.0
    %214 = vmatpush.msra.mxu0 0.0
    %215 = vmatpush.msra.mxu0 0.0
    %216 = vmatpush.msra.mxu0 0.0
    %217 = vmatpush.msra.mxu0 0.0
    %218 = vmatpush.msra.mxu0 0.0
    %219 = vmatpush.msra.mxu0 0.0
    %220 = vmatpush.msra.mxu0 0.0
    %221 = vmatpush.msra.mxu0 %v197
    %222 = vmatpush.msra.mxu0 %v196
    %223 = vmatpush.msra.mxu0 %v195
    %224 = vmatpush.msra.mxu0 %v194
    %225 = vmatmul.f32.gmra.mxu0 %v204
    %v226 = vpop.f32.mrf.mxu0
    %v227 = vadd.f32 %v200, %v226
    %228 = vmatmul.f32.gmra.mxu0 %v207
    %v229 = vpop.f32.mrf.mxu0
    %v230 = vadd.f32 %v200, %v229
    %231 = vdwg.mxu0
    %v232 = vmax.f32 %v227, 0.0
    %v233 = vmax.f32 %v230, 0.0
    %v234 = vld [vmem:[%s9] sm:$0xff]
    %v235 = vld [vmem:[%s9 + $0x8] sm:$0xff]
    %v236 = vld [vmem:[%s9 + $0x10] sm:$0xff]
    %v237 = vld [vmem:[%s9 + $0x18] sm:$0xff]
    %v238 = vld [vmem:[#allocation10] sm:$0x1]
    %v240 = vperm.slane %v238, 0
    %v243 = vsel %vm202, %v232, 0
    %v246 = vsel %vm202, %v233, 0
    %248 = vmatpush.msra.mxu0 0.0
    %249 = vmatpush.msra.mxu0 0.0
    %250 = vmatpush.msra.mxu0 0.0
    %251 = vmatpush.msra.mxu0 0.0
    %252 = vmatpush.msra.mxu0 0.0
    %253 = vmatpush.msra.mxu0 0.0
    %254 = vmatpush.msra.mxu0 0.0
    %255 = vmatpush.msra.mxu0 0.0
    %256 = vmatpush.msra.mxu0 0.0
    %257 = vmatpush.msra.mxu0 0.0
    %258 = vmatpush.msra.mxu0 0.0
    %259 = vmatpush.msra.mxu0 0.0
    %260 = vmatpush.msra.mxu0 %v237
    %261 = vmatpush.msra.mxu0 %v236
    %262 = vmatpush.msra.mxu0 %v235
    %263 = vmatpush.msra.mxu0 %v234
    %264 = vmatmul.f32.gmra.mxu0 %v243
    %v265 = vpop.f32.mrf.mxu0
    %v266 = vadd.f32 %v240, %v265
    %267 = vmatmul.f32.gmra.mxu0 %v246
    %v268 = vpop.f32.mrf.mxu0
    %v269 = vadd.f32 %v240, %v268
    %270 = vdwg.mxu0
    %v271 = vld [vmem:[%s11] sm:$0xff]
    %v272 = vld [vmem:[%s11 + $0x8] sm:$0xff]
    %v273 = vld [vmem:[%s11 + $0x10] sm:$0xff]
    %v274 = vld [vmem:[%s11 + $0x18] sm:$0xff]
    %v275 = vld [vmem:[%s1] sm:$0xff]
    %v276 = vld [vmem:[%s1 + $0x8] sm:$0xff]
    %v277 = vld [vmem:[%s12] sm:$0xff]
    %279 = vst [vmem:[#allocation1] ss:$2 sm:$0xff] %v277
    %v280 = vld.sshfl [vmem:[#allocation1] sm:$0xff pattern:$0x75316420]
    %v281 = vld.sshfl [vmem:[#allocation1 + $0x8] sm:$0xff pattern:$0x75316420]
    %vm282 = vcmask 31744
    %v284 = vsel %vm282, %v275, 0
    %v287 = vsel %vm282, %v276, 0
    %vm289 = vcmask 1043456
    %v290 = vsel %vm289, %v280, 0
    %v292 = vsel %vm289, %v281, 0
    %294 = vmatpush.msra.mxu0 0.0
    %295 = vmatpush.msra.mxu0 0.0
    %296 = vmatpush.msra.mxu0 0.0
    %297 = vmatpush.msra.mxu0 0.0
    %298 = vmatpush.msra.mxu0 0.0
    %299 = vmatpush.msra.mxu0 0.0
    %300 = vmatpush.msra.mxu0 0.0
    %301 = vmatpush.msra.mxu0 0.0
    %302 = vmatpush.msra.mxu0 0.0
    %303 = vmatpush.msra.mxu0 0.0
    %304 = vmatpush.msra.mxu0 0.0
    %305 = vmatpush.msra.mxu0 0.0
    %306 = vmatpush.msra.mxu0 0.0
    %307 = vmatpush.msra.mxu0 0.0
    %308 = vmatpush.msra.mxu0 0.0
    %309 = vmatpush.msra.mxu0 %v290
    %310 = vmatmul.f32.gmra.mxu0 %v284
    %v311 = vpop.f32.mrf.mxu0
    %v312 = vadd.f32 0.0, %v311
    %313 = vmatmul.f32.gmra.mxu0 %v287
    %v314 = vpop.f32.mrf.mxu0
    %v315 = vadd.f32 0.0, %v314
    %316 = vdwg.mxu0
    %317 = vmatpush.msra.mxu0 0.0
    %318 = vmatpush.msra.mxu0 0.0
    %319 = vmatpush.msra.mxu0 0.0
    %320 = vmatpush.msra.mxu0 0.0
    %321 = vmatpush.msra.mxu0 0.0
    %322 = vmatpush.msra.mxu0 0.0
    %323 = vmatpush.msra.mxu0 0.0
    %324 = vmatpush.msra.mxu0 0.0
    %325 = vmatpush.msra.mxu0 0.0
    %326 = vmatpush.msra.mxu0 0.0
    %327 = vmatpush.msra.mxu0 0.0
    %328 = vmatpush.msra.mxu0 0.0
    %329 = vmatpush.msra.mxu0 0.0
    %330 = vmatpush.msra.mxu0 0.0
    %331 = vmatpush.msra.mxu0 0.0
    %332 = vmatpush.msra.mxu0 %v292
    %333 = vmatmul.f32.gmra.mxu0 %v284
    %v334 = vpop.f32.mrf.mxu0
    %v335 = vadd.f32 0.0, %v334
    %336 = vmatmul.f32.gmra.mxu0 %v287
    %v337 = vpop.f32.mrf.mxu0
    %v338 = vadd.f32 0.0, %v337
    %339 = vdwg.mxu0
    %vm340 = vcmask 130048
    %v342 = vsel %vm340, %v266, 0
    %v345 = vsel %vm340, %v269, 0
    %347 = vmatpush.msra.mxu0 0.0
    %348 = vmatpush.msra.mxu0 0.0
    %349 = vmatpush.msra.mxu0 0.0
    %350 = vmatpush.msra.mxu0 0.0
    %351 = vmatpush.msra.mxu0 0.0
    %352 = vmatpush.msra.mxu0 0.0
    %353 = vmatpush.msra.mxu0 0.0
    %354 = vmatpush.msra.mxu0 0.0
    %355 = vmatpush.msra.mxu0 0.0
    %356 = vmatpush.msra.mxu0 0.0
    %357 = vmatpush.msra.mxu0 0.0
    %358 = vmatpush.msra.mxu0 0.0
    %359 = vmatpush.msra.mxu0 0.0
    %360 = vmatpush.msra.mxu0 0.0
    %361 = vmatpush.msra.mxu0 %v273
    %362 = vmatpush.msra.mxu0 %v271
    %363 = vmatmul.f32.gmra.mxu0 %v342
    %v364 = vpop.f32.mrf.mxu0
    %v365 = vadd.f32 %v312, %v364
    %366 = vmatmul.f32.gmra.mxu0 %v345
    %v367 = vpop.f32.mrf.mxu0
    %v368 = vadd.f32 %v315, %v367
    %369 = vdwg.mxu0
    %370 = vmatpush.msra.mxu0 0.0
    %371 = vmatpush.msra.mxu0 0.0
    %372 = vmatpush.msra.mxu0 0.0
    %373 = vmatpush.msra.mxu0 0.0
    %374 = vmatpush.msra.mxu0 0.0
    %375 = vmatpush.msra.mxu0 0.0
    %376 = vmatpush.msra.mxu0 0.0
    %377 = vmatpush.msra.mxu0 0.0
    %378 = vmatpush.msra.mxu0 0.0
    %379 = vmatpush.msra.mxu0 0.0
    %380 = vmatpush.msra.mxu0 0.0
    %381 = vmatpush.msra.mxu0 0.0
    %382 = vmatpush.msra.mxu0 0.0
    %383 = vmatpush.msra.mxu0 0.0
    %384 = vmatpush.msra.mxu0 %v274
    %385 = vmatpush.msra.mxu0 %v272
    %386 = vmatmul.f32.gmra.mxu0 %v342
    %v387 = vpop.f32.mrf.mxu0
    %v388 = vadd.f32 %v335, %v387
    %389 = vmatmul.f32.gmra.mxu0 %v345
    %v390 = vpop.f32.mrf.mxu0
    %v391 = vadd.f32 %v338, %v390
    %392 = vdwg.mxu0
    %v393 = vld [vmem:[%s2] sm:$0xff]
    %v394 = vld [vmem:[%s2 + $0x8] sm:$0xff]
    %v395 = vld [vmem:[%s13] sm:$0xf]
    %397 = vst [vmem:[#allocation1] ss:$4 sm:$0xff] %v395
    %v398 = vld.sshfl [vmem:[#allocation1] sm:$0xff pattern:$0x73625140]
    %v399 = vld.sshfl [vmem:[#allocation1 + $0x8] sm:$0xff pattern:$0x73625140]
    %vm400 = vcmask 15360
    %v402 = vsel %vm400, %v393, 0
    %v405 = vsel %vm400, %v394, 0
    %vm407 = vcmask 1041408
    %v408 = vsel %vm407, %v398, 0
    %v410 = vsel %vm407, %v399, 0
    %412 = vmatpush.msra.mxu0 0.0
    %413 = vmatpush.msra.mxu0 0.0
    %414 = vmatpush.msra.mxu0 0.0
    %415 = vmatpush.msra.mxu0 0.0
    %416 = vmatpush.msra.mxu0 0.0
    %417 = vmatpush.msra.mxu0 0.0
    %418 = vmatpush.msra.mxu0 0.0
    %419 = vmatpush.msra.mxu0 0.0
    %420 = vmatpush.msra.mxu0 0.0
    %421 = vmatpush.msra.mxu0 0.0
    %422 = vmatpush.msra.mxu0 0.0
    %423 = vmatpush.msra.mxu0 0.0
    %424 = vmatpush.msra.mxu0 0.0
    %425 = vmatpush.msra.mxu0 0.0
    %426 = vmatpush.msra.mxu0 0.0
    %427 = vmatpush.msra.mxu0 %v408
    %428 = vmatmul.f32.gmra.mxu0 %v402
    %v429 = vpop.f32.mrf.mxu0
    %v430 = vadd.f32 0.0, %v429
    %431 = vmatmul.f32.gmra.mxu0 %v405
    %v432 = vpop.f32.mrf.mxu0
    %v433 = vadd.f32 0.0, %v432
    %434 = vdwg.mxu0
    %435 = vmatpush.msra.mxu0 0.0
    %436 = vmatpush.msra.mxu0 0.0
    %437 = vmatpush.msra.mxu0 0.0
    %438 = vmatpush.msra.mxu0 0.0
    %439 = vmatpush.msra.mxu0 0.0
    %440 = vmatpush.msra.mxu0 0.0
    %441 = vmatpush.msra.mxu0 0.0
    %442 = vmatpush.msra.mxu0 0.0
    %443 = vmatpush.msra.mxu0 0.0
    %444 = vmatpush.msra.mxu0 0.0
    %445 = vmatpush.msra.mxu0 0.0
    %446 = vmatpush.msra.mxu0 0.0
    %447 = vmatpush.msra.mxu0 0.0
    %448 = vmatpush.msra.mxu0 0.0
    %449 = vmatpush.msra.mxu0 0.0
    %450 = vmatpush.msra.mxu0 %v410
    %451 = vmatmul.f32.gmra.mxu0 %v402
    %v452 = vpop.f32.mrf.mxu0
    %v453 = vadd.f32 0.0, %v452
    %454 = vmatmul.f32.gmra.mxu0 %v405
    %v455 = vpop.f32.mrf.mxu0
    %v456 = vadd.f32 0.0, %v455
    %457 = vdwg.mxu0
    %v458 = vadd.f32 %v365, %v430
    %v459 = vadd.f32 %v388, %v453
    %v460 = vadd.f32 %v368, %v433
    %v461 = vadd.f32 %v391, %v456
    %v462 = vld [vmem:[%s14] sm:$0x3]
    %v464 = vperm.slane %v462, 0
    %v465 = vperm.slane %v462, 1
    %v468 = vadd.f32 %v458, %v464
    %v469 = vadd.f32 %v459, %v465
    %v470 = vadd.f32 %v460, %v464
    %v471 = vadd.f32 %v461, %v465
    %v472 = vld [vmem:[#allocation11] sm:$0xff]
    %v473 = vld [vmem:[#allocation11 + $0x8] sm:$0xff]
    %v474 = vld [vmem:[#allocation11 + $0x10] sm:$0xff]
    %v475 = vld [vmem:[#allocation11 + $0x18] sm:$0xff]
    %v476 = vld [vmem:[#allocation11 + $0x20] sm:$0xff]
    %v477 = vld [vmem:[#allocation11 + $0x28] sm:$0xff]
    %v478 = vld [vmem:[#allocation11 + $0x30] sm:$0xff]
    %v479 = vld [vmem:[#allocation11 + $0x38] sm:$0xff]
    %v480 = vld [vmem:[#allocation11 + $0x40] sm:$0xff]
    %v481 = vld [vmem:[#allocation11 + $0x48] sm:$0xff]
    %v482 = vld [vmem:[#allocation11 + $0x50] sm:$0xff]
    %v483 = vld [vmem:[#allocation11 + $0x58] sm:$0xff]
    %v484 = vld [vmem:[#allocation11 + $0x60] sm:$0xff]
    %v485 = vld [vmem:[#allocation11 + $0x68] sm:$0xff]
    %v486 = vld [vmem:[#allocation11 + $0x70] sm:$0xff]
    %v487 = vld [vmem:[#allocation11 + $0x78] sm:$0xff]
    %v488 = vld [vmem:[%s3] sm:$0x3]
    %v489 = vld [vmem:[#allocation5] sm:$0x3]
    %vm490 = vcmask 523264
    %v492 = vsel %vm490, %v488, 0
    %494 = vmatpush.msra.mxu0 0.0
    %495 = vmatpush.msra.mxu0 0.0
    %496 = vmatpush.msra.mxu0 0.0
    %497 = vmatpush.msra.mxu0 0.0
    %498 = vmatpush.msra.mxu0 0.0
    %499 = vmatpush.msra.mxu0 0.0
    %500 = vmatpush.msra.mxu0 0.0
    %501 = vmatpush.msra.mxu0 0.0
    %502 = vmatpush.msra.mxu0 %v486
    %503 = vmatpush.msra.mxu0 %v484
    %504 = vmatpush.msra.mxu0 %v482
    %505 = vmatpush.msra.mxu0 %v480
    %506 = vmatpush.msra.mxu0 %v478
    %507 = vmatpush.msra.mxu0 %v476
    %508 = vmatpush.msra.mxu0 %v474
    %509 = vmatpush.msra.mxu0 %v472
    %510 = vmatmul.f32.gmra.mxu0 %v492
    %v511 = vpop.f32.mrf.mxu0
    %v512 = vadd.f32 0.0, %v511
    %513 = vdwg.mxu0
    %514 = vmatpush.msra.mxu0 0.0
    %515 = vmatpush.msra.mxu0 0.0
    %516 = vmatpush.msra.mxu0 0.0
    %517 = vmatpush.msra.mxu0 0.0
    %518 = vmatpush.msra.mxu0 0.0
    %519 = vmatpush.msra.mxu0 0.0
    %520 = vmatpush.msra.mxu0 0.0
    %521 = vmatpush.msra.mxu0 0.0
    %522 = vmatpush.msra.mxu0 %v487
    %523 = vmatpush.msra.mxu0 %v485
    %524 = vmatpush.msra.mxu0 %v483
    %525 = vmatpush.msra.mxu0 %v481
    %526 = vmatpush.msra.mxu0 %v479
    %527 = vmatpush.msra.mxu0 %v477
    %528 = vmatpush.msra.mxu0 %v475
    %529 = vmatpush.msra.mxu0 %v473
    %530 = vmatmul.f32.gmra.mxu0 %v492
    %v531 = vpop.f32.mrf.mxu0
    %v532 = vadd.f32 0.0, %v531
    %533 = vdwg.mxu0
    %v534 = vadd.f32 %v468, %v512
    %v535 = vadd.f32 %v469, %v532
    %v536 = vxor.u32 %v534, 2147483648
    %v537 = vmul.f32 %v536, 1.442695
    %v538 = vpow.pop %v537
    %v539 = vadd.f32 %v538, 1.0
    %v540 = vrcp.pop %v539
    %v541 = vmul.f32 %v539, %v540
    %v542 = vsub.f32 1.0, %v541
    %v543 = vmul.f32 %v540, %v542
    %v544 = vadd.f32 %v540, %v543
    %vm545 = vweird.f32 %v539
    %vm546 = vweird.f32 %v540
    %vm547 = vmor %vm545, %vm546
    %v548 = vsel %vm547, %v540, %v544
    %v549 = vand.u32 2147483647, %v539
    %vm550 = vcmp.eq.f32.partialorder %v549, 8.507059e+37
    %v551 = vand.u32 %v539, 2147483648
    %v552 = vor.u32 1.1754944e-38, %v551
    %v553 = vsel %vm550, %v552, %v548
    %v554 = vmul.f32 1.0, %v553
    %v555 = vtanh.pop %v535
    %v556 = vxor.u32 %v535, 2147483648
    %v557 = vmul.f32 %v556, 1.442695
    %v558 = vpow.pop %v557
    %v559 = vadd.f32 %v558, 1.0
    %v560 = vrcp.pop %v559
    %v561 = vmul.f32 %v559, %v560
    %v562 = vsub.f32 1.0, %v561
    %v563 = vmul.f32 %v560, %v562
    %v564 = vadd.f32 %v560, %v563
    %vm565 = vweird.f32 %v559
    %vm566 = vweird.f32 %v560
    %vm567 = vmor %vm565, %vm566
    %v568 = vsel %vm567, %v560, %v564
    %v569 = vand.u32 2147483647, %v559
    %vm570 = vcmp.eq.f32.partialorder %v569, 8.507059e+37
    %v571 = vand.u32 %v559, 2147483648
    %v572 = vor.u32 1.1754944e-38, %v571
    %v573 = vsel %vm570, %v572, %v568
    %v574 = vmul.f32 1.0, %v573
    %576 = vrot.lane.b32.xlu0 %v489, 64
    %v577 = vpop.permute.xlu0 %576
    %v579 = vmul.f32 %v554, %v577
    %v580 = vmul.f32 %v554, %v555
    %582 = vrot.lane.b32.xlu0 %v580, 64
    %v583 = vpop.permute.xlu0 %582
    %v585 = vadd.f32 %v579, %v583
    %v586 = vtanh.pop %v585
    %v587 = vmul.f32 %v574, %v586
    %589 = vrot.lane.b32.xlu0 %v587, 64
    %v590 = vpop.permute.xlu0 %589
    %vm592 = vcmask 517120
    %593 = vst.msk [vmem:[#allocation2] sm:$0x3] %vm592, %v590
    %v594 = vsel %vm490, %v590, 0
    %596 = vmatpush.msra.mxu0 0.0
    %597 = vmatpush.msra.mxu0 0.0
    %598 = vmatpush.msra.mxu0 0.0
    %599 = vmatpush.msra.mxu0 0.0
    %600 = vmatpush.msra.mxu0 0.0
    %601 = vmatpush.msra.mxu0 0.0
    %602 = vmatpush.msra.mxu0 0.0
    %603 = vmatpush.msra.mxu0 0.0
    %604 = vmatpush.msra.mxu0 %v486
    %605 = vmatpush.msra.mxu0 %v484
    %606 = vmatpush.msra.mxu0 %v482
    %607 = vmatpush.msra.mxu0 %v480
    %608 = vmatpush.msra.mxu0 %v478
    %609 = vmatpush.msra.mxu0 %v476
    %610 = vmatpush.msra.mxu0 %v474
    %611 = vmatpush.msra.mxu0 %v472
    %612 = vmatmul.f32.gmra.mxu0 %v594
    %v613 = vpop.f32.mrf.mxu0
    %v614 = vadd.f32 0.0, %v613
    %615 = vdwg.mxu0
    %616 = vmatpush.msra.mxu0 0.0
    %617 = vmatpush.msra.mxu0 0.0
    %618 = vmatpush.msra.mxu0 0.0
    %619 = vmatpush.msra.mxu0 0.0
    %620 = vmatpush.msra.mxu0 0.0
    %621 = vmatpush.msra.mxu0 0.0
    %622 = vmatpush.msra.mxu0 0.0
    %623 = vmatpush.msra.mxu0 0.0
    %624 = vmatpush.msra.mxu0 %v487
    %625 = vmatpush.msra.mxu0 %v485
    %626 = vmatpush.msra.mxu0 %v483
    %627 = vmatpush.msra.mxu0 %v481
    %628 = vmatpush.msra.mxu0 %v479
    %629 = vmatpush.msra.mxu0 %v477
    %630 = vmatpush.msra.mxu0 %v475
    %631 = vmatpush.msra.mxu0 %v473
    %632 = vmatmul.f32.gmra.mxu0 %v594
    %v633 = vpop.f32.mrf.mxu0
    %v634 = vadd.f32 0.0, %v633
    %635 = vdwg.mxu0
    %v638 = vrot.slane %v614, 6
    %v639 = vrot.slane %v634, 6
    %v642 = vadd.f32 %v468, %v638
    %v643 = vadd.f32 %v469, %v639
    %v644 = vxor.u32 %v642, 2147483648
    %v645 = vmul.f32 %v644, 1.442695
    %v646 = vpow.pop %v645
    %v647 = vadd.f32 %v646, 1.0
    %v648 = vrcp.pop %v647
    %v649 = vmul.f32 %v647, %v648
    %v650 = vsub.f32 1.0, %v649
    %v651 = vmul.f32 %v648, %v650
    %v652 = vadd.f32 %v648, %v651
    %vm653 = vweird.f32 %v647
    %vm654 = vweird.f32 %v648
    %vm655 = vmor %vm653, %vm654
    %v656 = vsel %vm655, %v648, %v652
    %v657 = vand.u32 2147483647, %v647
    %vm658 = vcmp.eq.f32.partialorder %v657, 8.507059e+37
    %v659 = vand.u32 %v647, 2147483648
    %v660 = vor.u32 1.1754944e-38, %v659
    %v661 = vsel %vm658, %v660, %v656
    %v662 = vmul.f32 1.0, %v661
    %v663 = vtanh.pop %v643
    %v664 = vxor.u32 %v643, 2147483648
    %v665 = vmul.f32 %v664, 1.442695
    %v666 = vpow.pop %v665
    %v667 = vadd.f32 %v666, 1.0
    %v668 = vrcp.pop %v667
    %v669 = vmul.f32 %v667, %v668
    %v670 = vsub.f32 1.0, %v669
    %v671 = vmul.f32 %v668, %v670
    %v672 = vadd.f32 %v668, %v671
    %vm673 = vweird.f32 %v667
    %vm674 = vweird.f32 %v668
    %vm675 = vmor %vm673, %vm674
    %v676 = vsel %vm675, %v668, %v672
    %v677 = vand.u32 2147483647, %v667
    %vm678 = vcmp.eq.f32.partialorder %v677, 8.507059e+37
    %v679 = vand.u32 %v667, 2147483648
    %v680 = vor.u32 1.1754944e-38, %v679
    %v681 = vsel %vm678, %v680, %v676
    %v682 = vmul.f32 1.0, %v681
    %v684 = vrot.slane %v585, 6
    %v686 = vmul.f32 %v662, %v684
    %v687 = vmul.f32 %v662, %v663
    %689 = vrot.lane.b32.xlu0 %v687, 64
    %v690 = vpop.permute.xlu0 %689
    %v692 = vadd.f32 %v686, %v690
    %v693 = vtanh.pop %v692
    %v694 = vmul.f32 %v682, %v693
    %696 = vrot.lane.b32.xlu0 %v694, 64
    %v697 = vpop.permute.xlu0 %696
    %vm699 = vcmask 519170
    %700 = vst.msk [vmem:[#allocation2] sm:$0xc] %vm699, %v697
    %v701 = vrot.slane %v694, 2
    %702 = vrot.lane.b32.xlu0 %v701, 64
    %v703 = vpop.permute.xlu0 %702
    %v704 = vsel %vm490, %v703, 0
    %706 = vmatpush.msra.mxu0 0.0
    %707 = vmatpush.msra.mxu0 0.0
    %708 = vmatpush.msra.mxu0 0.0
    %709 = vmatpush.msra.mxu0 0.0
    %710 = vmatpush.msra.mxu0 0.0
    %711 = vmatpush.msra.mxu0 0.0
    %712 = vmatpush.msra.mxu0 0.0
    %713 = vmatpush.msra.mxu0 0.0
    %714 = vmatpush.msra.mxu0 %v486
    %715 = vmatpush.msra.mxu0 %v484
    %716 = vmatpush.msra.mxu0 %v482
    %717 = vmatpush.msra.mxu0 %v480
    %718 = vmatpush.msra.mxu0 %v478
    %719 = vmatpush.msra.mxu0 %v476
    %720 = vmatpush.msra.mxu0 %v474
    %721 = vmatpush.msra.mxu0 %v472
    %722 = vmatmul.f32.gmra.mxu0 %v704
    %v723 = vpop.f32.mrf.mxu0
    %v724 = vadd.f32 0.0, %v723
    %725 = vdwg.mxu0
    %726 = vmatpush.msra.mxu0 0.0
    %727 = vmatpush.msra.mxu0 0.0
    %728 = vmatpush.msra.mxu0 0.0
    %729 = vmatpush.msra.mxu0 0.0
    %730 = vmatpush.msra.mxu0 0.0
    %731 = vmatpush.msra.mxu0 0.0
    %732 = vmatpush.msra.mxu0 0.0
    %733 = vmatpush.msra.mxu0 0.0
    %734 = vmatpush.msra.mxu0 %v487
    %735 = vmatpush.msra.mxu0 %v485
    %736 = vmatpush.msra.mxu0 %v483
    %737 = vmatpush.msra.mxu0 %v481
    %738 = vmatpush.msra.mxu0 %v479
    %739 = vmatpush.msra.mxu0 %v477
    %740 = vmatpush.msra.mxu0 %v475
    %741 = vmatpush.msra.mxu0 %v473
    %742 = vmatmul.f32.gmra.mxu0 %v704
    %v743 = vpop.f32.mrf.mxu0
    %v744 = vadd.f32 0.0, %v743
    %745 = vdwg.mxu0
    %v748 = vrot.slane %v724, 4
    %v749 = vrot.slane %v744, 4
    %v752 = vadd.f32 %v468, %v748
    %v753 = vadd.f32 %v469, %v749
    %v754 = vxor.u32 %v752, 2147483648
    %v755 = vmul.f32 %v754, 1.442695
    %v756 = vpow.pop %v755
    %v757 = vadd.f32 %v756, 1.0
    %v758 = vrcp.pop %v757
    %v759 = vmul.f32 %v757, %v758
    %v760 = vsub.f32 1.0, %v759
    %v761 = vmul.f32 %v758, %v760
    %v762 = vadd.f32 %v758, %v761
    %vm763 = vweird.f32 %v757
    %vm764 = vweird.f32 %v758
    %vm765 = vmor %vm763, %vm764
    %v766 = vsel %vm765, %v758, %v762
    %v767 = vand.u32 2147483647, %v757
    %vm768 = vcmp.eq.f32.partialorder %v767, 8.507059e+37
    %v769 = vand.u32 %v757, 2147483648
    %v770 = vor.u32 1.1754944e-38, %v769
    %v771 = vsel %vm768, %v770, %v766
    %v772 = vmul.f32 1.0, %v771
    %v773 = vtanh.pop %v753
    %v774 = vxor.u32 %v753, 2147483648
    %v775 = vmul.f32 %v774, 1.442695
    %v776 = vpow.pop %v775
    %v777 = vadd.f32 %v776, 1.0
    %v778 = vrcp.pop %v777
    %v779 = vmul.f32 %v777, %v778
    %v780 = vsub.f32 1.0, %v779
    %v781 = vmul.f32 %v778, %v780
    %v782 = vadd.f32 %v778, %v781
    %vm783 = vweird.f32 %v777
    %vm784 = vweird.f32 %v778
    %vm785 = vmor %vm783, %vm784
    %v786 = vsel %vm785, %v778, %v782
    %v787 = vand.u32 2147483647, %v777
    %vm788 = vcmp.eq.f32.partialorder %v787, 8.507059e+37
    %v789 = vand.u32 %v777, 2147483648
    %v790 = vor.u32 1.1754944e-38, %v789
    %v791 = vsel %vm788, %v790, %v786
    %v792 = vmul.f32 1.0, %v791
    %v794 = vrot.slane %v692, 6
    %v796 = vmul.f32 %v772, %v794
    %v797 = vmul.f32 %v772, %v773
    %799 = vrot.lane.b32.xlu0 %v797, 64
    %v800 = vpop.permute.xlu0 %799
    %v802 = vadd.f32 %v796, %v800
    %v803 = vtanh.pop %v802
    %v804 = vmul.f32 %v792, %v803
    %806 = vrot.lane.b32.xlu0 %v804, 64
    %v807 = vpop.permute.xlu0 %806
    %vm809 = vcmask 521220
    %810 = vst.msk [vmem:[#allocation2] sm:$0x30] %vm809, %v807
    %v811 = vrot.slane %v804, 4
    %812 = vrot.lane.b32.xlu0 %v811, 64
    %v813 = vpop.permute.xlu0 %812
    %v814 = vsel %vm490, %v813, 0
    %816 = vmatpush.msra.mxu0 0.0
    %817 = vmatpush.msra.mxu0 0.0
    %818 = vmatpush.msra.mxu0 0.0
    %819 = vmatpush.msra.mxu0 0.0
    %820 = vmatpush.msra.mxu0 0.0
    %821 = vmatpush.msra.mxu0 0.0
    %822 = vmatpush.msra.mxu0 0.0
    %823 = vmatpush.msra.mxu0 0.0
    %824 = vmatpush.msra.mxu0 %v486
    %825 = vmatpush.msra.mxu0 %v484
    %826 = vmatpush.msra.mxu0 %v482
    %827 = vmatpush.msra.mxu0 %v480
    %828 = vmatpush.msra.mxu0 %v478
    %829 = vmatpush.msra.mxu0 %v476
    %830 = vmatpush.msra.mxu0 %v474
    %831 = vmatpush.msra.mxu0 %v472
    %832 = vmatmul.f32.gmra.mxu0 %v814
    %v833 = vpop.f32.mrf.mxu0
    %v834 = vadd.f32 0.0, %v833
    %835 = vdwg.mxu0
    %836 = vmatpush.msra.mxu0 0.0
    %837 = vmatpush.msra.mxu0 0.0
    %838 = vmatpush.msra.mxu0 0.0
    %839 = vmatpush.msra.mxu0 0.0
    %840 = vmatpush.msra.mxu0 0.0
    %841 = vmatpush.msra.mxu0 0.0
    %842 = vmatpush.msra.mxu0 0.0
    %843 = vmatpush.msra.mxu0 0.0
    %844 = vmatpush.msra.mxu0 %v487
    %845 = vmatpush.msra.mxu0 %v485
    %846 = vmatpush.msra.mxu0 %v483
    %847 = vmatpush.msra.mxu0 %v481
    %848 = vmatpush.msra.mxu0 %v479
    %849 = vmatpush.msra.mxu0 %v477
    %850 = vmatpush.msra.mxu0 %v475
    %851 = vmatpush.msra.mxu0 %v473
    %852 = vmatmul.f32.gmra.mxu0 %v814
    %v853 = vpop.f32.mrf.mxu0
    %v854 = vadd.f32 0.0, %v853
    %855 = vdwg.mxu0
    %v858 = vrot.slane %v834, 2
    %v859 = vrot.slane %v854, 2
    %v862 = vadd.f32 %v468, %v858
    %v863 = vadd.f32 %v469, %v859
    %v864 = vxor.u32 %v862, 2147483648
    %v865 = vmul.f32 %v864, 1.442695
    %v866 = vpow.pop %v865
    %v867 = vadd.f32 %v866, 1.0
    %v868 = vrcp.pop %v867
    %v869 = vmul.f32 %v867, %v868
    %v870 = vsub.f32 1.0, %v869
    %v871 = vmul.f32 %v868, %v870
    %v872 = vadd.f32 %v868, %v871
    %vm873 = vweird.f32 %v867
    %vm874 = vweird.f32 %v868
    %vm875 = vmor %vm873, %vm874
    %v876 = vsel %vm875, %v868, %v872
    %v877 = vand.u32 2147483647, %v867
    %vm878 = vcmp.eq.f32.partialorder %v877, 8.507059e+37
    %v879 = vand.u32 %v867, 2147483648
    %v880 = vor.u32 1.1754944e-38, %v879
    %v881 = vsel %vm878, %v880, %v876
    %v882 = vmul.f32 1.0, %v881
    %v883 = vtanh.pop %v863
    %v884 = vxor.u32 %v863, 2147483648
    %v885 = vmul.f32 %v884, 1.442695
    %v886 = vpow.pop %v885
    %v887 = vadd.f32 %v886, 1.0
    %v888 = vrcp.pop %v887
    %v889 = vmul.f32 %v887, %v888
    %v890 = vsub.f32 1.0, %v889
    %v891 = vmul.f32 %v888, %v890
    %v892 = vadd.f32 %v888, %v891
    %vm893 = vweird.f32 %v887
    %vm894 = vweird.f32 %v888
    %vm895 = vmor %vm893, %vm894
    %v896 = vsel %vm895, %v888, %v892
    %v897 = vand.u32 2147483647, %v887
    %vm898 = vcmp.eq.f32.partialorder %v897, 8.507059e+37
    %v899 = vand.u32 %v887, 2147483648
    %v900 = vor.u32 1.1754944e-38, %v899
    %v901 = vsel %vm898, %v900, %v896
    %v902 = vmul.f32 1.0, %v901
    %v904 = vrot.slane %v802, 6
    %v906 = vmul.f32 %v882, %v904
    %v907 = vmul.f32 %v882, %v883
    %909 = vrot.lane.b32.xlu0 %v907, 64
    %v910 = vpop.permute.xlu0 %909
    %v912 = vadd.f32 %v906, %v910
    %v913 = vtanh.pop %v912
    %v914 = vmul.f32 %v902, %v913
    %916 = vrot.lane.b32.xlu0 %v914, 64
    %v917 = vpop.permute.xlu0 %916
    %vm919 = vcmask 523270
    %920 = vst.msk [vmem:[#allocation2] sm:$0xc0] %vm919, %v917
    %v921 = vrot.slane %v914, 6
    %922 = vrot.lane.b32.xlu0 %v921, 64
    %v923 = vpop.permute.xlu0 %922
    %v924 = vsel %vm490, %v923, 0
    %926 = vmatpush.msra.mxu0 0.0
    %927 = vmatpush.msra.mxu0 0.0
    %928 = vmatpush.msra.mxu0 0.0
    %929 = vmatpush.msra.mxu0 0.0
    %930 = vmatpush.msra.mxu0 0.0
    %931 = vmatpush.msra.mxu0 0.0
    %932 = vmatpush.msra.mxu0 0.0
    %933 = vmatpush.msra.mxu0 0.0
    %934 = vmatpush.msra.mxu0 %v486
    %935 = vmatpush.msra.mxu0 %v484
    %936 = vmatpush.msra.mxu0 %v482
    %937 = vmatpush.msra.mxu0 %v480
    %938 = vmatpush.msra.mxu0 %v478
    %939 = vmatpush.msra.mxu0 %v476
    %940 = vmatpush.msra.mxu0 %v474
    %941 = vmatpush.msra.mxu0 %v472
    %942 = vmatmul.f32.gmra.mxu0 %v924
    %v943 = vpop.f32.mrf.mxu0
    %v944 = vadd.f32 0.0, %v943
    %945 = vdwg.mxu0
    %946 = vmatpush.msra.mxu0 0.0
    %947 = vmatpush.msra.mxu0 0.0
    %948 = vmatpush.msra.mxu0 0.0
    %949 = vmatpush.msra.mxu0 0.0
    %950 = vmatpush.msra.mxu0 0.0
    %951 = vmatpush.msra.mxu0 0.0
    %952 = vmatpush.msra.mxu0 0.0
    %953 = vmatpush.msra.mxu0 0.0
    %954 = vmatpush.msra.mxu0 %v487
    %955 = vmatpush.msra.mxu0 %v485
    %956 = vmatpush.msra.mxu0 %v483
    %957 = vmatpush.msra.mxu0 %v481
    %958 = vmatpush.msra.mxu0 %v479
    %959 = vmatpush.msra.mxu0 %v477
    %960 = vmatpush.msra.mxu0 %v475
    %961 = vmatpush.msra.mxu0 %v473
    %962 = vmatmul.f32.gmra.mxu0 %v924
    %v963 = vpop.f32.mrf.mxu0
    %v964 = vadd.f32 0.0, %v963
    %965 = vdwg.mxu0
    %v966 = vadd.f32 %v470, %v944
    %v967 = vadd.f32 %v471, %v964
    %v968 = vxor.u32 %v966, 2147483648
    %v969 = vmul.f32 %v968, 1.442695
    %v970 = vpow.pop %v969
    %v971 = vadd.f32 %v970, 1.0
    %v972 = vrcp.pop %v971
    %v973 = vmul.f32 %v971, %v972
    %v974 = vsub.f32 1.0, %v973
    %v975 = vmul.f32 %v972, %v974
    %v976 = vadd.f32 %v972, %v975
    %vm977 = vweird.f32 %v971
    %vm978 = vweird.f32 %v972
    %vm979 = vmor %vm977, %vm978
    %v980 = vsel %vm979, %v972, %v976
    %v981 = vand.u32 2147483647, %v971
    %vm982 = vcmp.eq.f32.partialorder %v981, 8.507059e+37
    %v983 = vand.u32 %v971, 2147483648
    %v984 = vor.u32 1.1754944e-38, %v983
    %v985 = vsel %vm982, %v984, %v980
    %v986 = vmul.f32 1.0, %v985
    %v987 = vtanh.pop %v967
    %v988 = vxor.u32 %v967, 2147483648
    %v989 = vmul.f32 %v988, 1.442695
    %v990 = vpow.pop %v989
    %v991 = vadd.f32 %v990, 1.0
    %v992 = vrcp.pop %v991
    %v993 = vmul.f32 %v991, %v992
    %v994 = vsub.f32 1.0, %v993
    %v995 = vmul.f32 %v992, %v994
    %v996 = vadd.f32 %v992, %v995
    %vm997 = vweird.f32 %v991
    %vm998 = vweird.f32 %v992
    %vm999 = vmor %vm997, %vm998
    %v1000 = vsel %vm999, %v992, %v996
    %v1001 = vand.u32 2147483647, %v991
    %vm1002 = vcmp.eq.f32.partialorder %v1001, 8.507059e+37
    %v1003 = vand.u32 %v991, 2147483648
    %v1004 = vor.u32 1.1754944e-38, %v1003
    %v1005 = vsel %vm1002, %v1004, %v1000
    %v1006 = vmul.f32 1.0, %v1005
    %v1008 = vrot.slane %v912, 6
    %v1010 = vmul.f32 %v986, %v1008
    %v1011 = vmul.f32 %v986, %v987
    %1013 = vrot.lane.b32.xlu0 %v1011, 64
    %v1014 = vpop.permute.xlu0 %1013
    %v1016 = vadd.f32 %v1010, %v1014
    %v1017 = vtanh.pop %v1016
    %v1018 = vmul.f32 %v1006, %v1017
    %1020 = vrot.lane.b32.xlu0 %v1018, 64
    %v1021 = vpop.permute.xlu0 %1020
    %1023 = vst.msk [vmem:[#allocation2 + $0x8] sm:$0x3] %vm592, %v1021
    %v1024 = vsel %vm490, %v1021, 0
    %1026 = vmatpush.msra.mxu0 0.0
    %1027 = vmatpush.msra.mxu0 0.0
    %1028 = vmatpush.msra.mxu0 0.0
    %1029 = vmatpush.msra.mxu0 0.0
    %1030 = vmatpush.msra.mxu0 0.0
    %1031 = vmatpush.msra.mxu0 0.0
    %1032 = vmatpush.msra.mxu0 0.0
    %1033 = vmatpush.msra.mxu0 0.0
    %1034 = vmatpush.msra.mxu0 %v486
    %1035 = vmatpush.msra.mxu0 %v484
    %1036 = vmatpush.msra.mxu0 %v482
    %1037 = vmatpush.msra.mxu0 %v480
    %1038 = vmatpush.msra.mxu0 %v478
    %1039 = vmatpush.msra.mxu0 %v476
    %1040 = vmatpush.msra.mxu0 %v474
    %1041 = vmatpush.msra.mxu0 %v472
    %1042 = vmatmul.f32.gmra.mxu0 %v1024
    %v1043 = vpop.f32.mrf.mxu0
    %v1044 = vadd.f32 0.0, %v1043
    %1045 = vdwg.mxu0
    %1046 = vmatpush.msra.mxu0 0.0
    %1047 = vmatpush.msra.mxu0 0.0
    %1048 = vmatpush.msra.mxu0 0.0
    %1049 = vmatpush.msra.mxu0 0.0
    %1050 = vmatpush.msra.mxu0 0.0
    %1051 = vmatpush.msra.mxu0 0.0
    %1052 = vmatpush.msra.mxu0 0.0
    %1053 = vmatpush.msra.mxu0 0.0
    %1054 = vmatpush.msra.mxu0 %v487
    %1055 = vmatpush.msra.mxu0 %v485
    %1056 = vmatpush.msra.mxu0 %v483
    %1057 = vmatpush.msra.mxu0 %v481
    %1058 = vmatpush.msra.mxu0 %v479
    %1059 = vmatpush.msra.mxu0 %v477
    %1060 = vmatpush.msra.mxu0 %v475
    %1061 = vmatpush.msra.mxu0 %v473
    %1062 = vmatmul.f32.gmra.mxu0 %v1024
    %v1063 = vpop.f32.mrf.mxu0
    %v1064 = vadd.f32 0.0, %v1063
    %1065 = vdwg.mxu0
    %v1068 = vrot.slane %v1044, 6
    %v1069 = vrot.slane %v1064, 6
    %v1072 = vadd.f32 %v470, %v1068
    %v1073 = vadd.f32 %v471, %v1069
    %v1074 = vxor.u32 %v1072, 2147483648
    %v1075 = vmul.f32 %v1074, 1.442695
    %v1076 = vpow.pop %v1075
    %v1077 = vadd.f32 %v1076, 1.0
    %v1078 = vrcp.pop %v1077
    %v1079 = vmul.f32 %v1077, %v1078
    %v1080 = vsub.f32 1.0, %v1079
    %v1081 = vmul.f32 %v1078, %v1080
    %v1082 = vadd.f32 %v1078, %v1081
    %vm1083 = vweird.f32 %v1077
    %vm1084 = vweird.f32 %v1078
    %vm1085 = vmor %vm1083, %vm1084
    %v1086 = vsel %vm1085, %v1078, %v1082
    %v1087 = vand.u32 2147483647, %v1077
    %vm1088 = vcmp.eq.f32.partialorder %v1087, 8.507059e+37
    %v1089 = vand.u32 %v1077, 2147483648
    %v1090 = vor.u32 1.1754944e-38, %v1089
    %v1091 = vsel %vm1088, %v1090, %v1086
    %v1092 = vmul.f32 1.0, %v1091
    %v1093 = vtanh.pop %v1073
    %v1094 = vxor.u32 %v1073, 2147483648
    %v1095 = vmul.f32 %v1094, 1.442695
    %v1096 = vpow.pop %v1095
    %v1097 = vadd.f32 %v1096, 1.0
    %v1098 = vrcp.pop %v1097
    %v1099 = vmul.f32 %v1097, %v1098
    %v1100 = vsub.f32 1.0, %v1099
    %v1101 = vmul.f32 %v1098, %v1100
    %v1102 = vadd.f32 %v1098, %v1101
    %vm1103 = vweird.f32 %v1097
    %vm1104 = vweird.f32 %v1098
    %vm1105 = vmor %vm1103, %vm1104
    %v1106 = vsel %vm1105, %v1098, %v1102
    %v1107 = vand.u32 2147483647, %v1097
    %vm1108 = vcmp.eq.f32.partialorder %v1107, 8.507059e+37
    %v1109 = vand.u32 %v1097, 2147483648
    %v1110 = vor.u32 1.1754944e-38, %v1109
    %v1111 = vsel %vm1108, %v1110, %v1106
    %v1112 = vmul.f32 1.0, %v1111
    %v1114 = vrot.slane %v1016, 6
    %v1116 = vmul.f32 %v1092, %v1114
    %v1117 = vmul.f32 %v1092, %v1093
    %1119 = vrot.lane.b32.xlu0 %v1117, 64
    %v1120 = vpop.permute.xlu0 %1119
    %v1122 = vadd.f32 %v1116, %v1120
    %v1123 = vtanh.pop %v1122
    %v1124 = vmul.f32 %v1112, %v1123
    %1126 = vrot.lane.b32.xlu0 %v1124, 64
    %v1127 = vpop.permute.xlu0 %1126
    %1129 = vst.msk [vmem:[#allocation2 + $0x8] sm:$0xc] %vm699, %v1127
    %v1130 = vrot.slane %v1124, 2
    %1131 = vrot.lane.b32.xlu0 %v1130, 64
    %v1132 = vpop.permute.xlu0 %1131
    %v1133 = vsel %vm490, %v1132, 0
    %1135 = vmatpush.msra.mxu0 0.0
    %1136 = vmatpush.msra.mxu0 0.0
    %1137 = vmatpush.msra.mxu0 0.0
    %1138 = vmatpush.msra.mxu0 0.0
    %1139 = vmatpush.msra.mxu0 0.0
    %1140 = vmatpush.msra.mxu0 0.0
    %1141 = vmatpush.msra.mxu0 0.0
    %1142 = vmatpush.msra.mxu0 0.0
    %1143 = vmatpush.msra.mxu0 %v486
    %1144 = vmatpush.msra.mxu0 %v484
    %1145 = vmatpush.msra.mxu0 %v482
    %1146 = vmatpush.msra.mxu0 %v480
    %1147 = vmatpush.msra.mxu0 %v478
    %1148 = vmatpush.msra.mxu0 %v476
    %1149 = vmatpush.msra.mxu0 %v474
    %1150 = vmatpush.msra.mxu0 %v472
    %1151 = vmatmul.f32.gmra.mxu0 %v1133
    %v1152 = vpop.f32.mrf.mxu0
    %v1153 = vadd.f32 0.0, %v1152
    %1154 = vdwg.mxu0
    %1155 = vmatpush.msra.mxu0 0.0
    %1156 = vmatpush.msra.mxu0 0.0
    %1157 = vmatpush.msra.mxu0 0.0
    %1158 = vmatpush.msra.mxu0 0.0
    %1159 = vmatpush.msra.mxu0 0.0
    %1160 = vmatpush.msra.mxu0 0.0
    %1161 = vmatpush.msra.mxu0 0.0
    %1162 = vmatpush.msra.mxu0 0.0
    %1163 = vmatpush.msra.mxu0 %v487
    %1164 = vmatpush.msra.mxu0 %v485
    %1165 = vmatpush.msra.mxu0 %v483
    %1166 = vmatpush.msra.mxu0 %v481
    %1167 = vmatpush.msra.mxu0 %v479
    %1168 = vmatpush.msra.mxu0 %v477
    %1169 = vmatpush.msra.mxu0 %v475
    %1170 = vmatpush.msra.mxu0 %v473
    %1171 = vmatmul.f32.gmra.mxu0 %v1133
    %v1172 = vpop.f32.mrf.mxu0
    %v1173 = vadd.f32 0.0, %v1172
    %1174 = vdwg.mxu0
    %v1177 = vrot.slane %v1153, 4
    %v1178 = vrot.slane %v1173, 4
    %v1181 = vadd.f32 %v470, %v1177
    %v1182 = vadd.f32 %v471, %v1178
    %v1183 = vxor.u32 %v1181, 2147483648
    %v1184 = vmul.f32 %v1183, 1.442695
    %v1185 = vpow.pop %v1184
    %v1186 = vadd.f32 %v1185, 1.0
    %v1187 = vrcp.pop %v1186
    %v1188 = vmul.f32 %v1186, %v1187
    %v1189 = vsub.f32 1.0, %v1188
    %v1190 = vmul.f32 %v1187, %v1189
    %v1191 = vadd.f32 %v1187, %v1190
    %vm1192 = vweird.f32 %v1186
    %vm1193 = vweird.f32 %v1187
    %vm1194 = vmor %vm1192, %vm1193
    %v1195 = vsel %vm1194, %v1187, %v1191
    %v1196 = vand.u32 2147483647, %v1186
    %vm1197 = vcmp.eq.f32.partialorder %v1196, 8.507059e+37
    %v1198 = vand.u32 %v1186, 2147483648
    %v1199 = vor.u32 1.1754944e-38, %v1198
    %v1200 = vsel %vm1197, %v1199, %v1195
    %v1201 = vmul.f32 1.0, %v1200
    %v1202 = vtanh.pop %v1182
    %v1203 = vxor.u32 %v1182, 2147483648
    %v1204 = vmul.f32 %v1203, 1.442695
    %v1205 = vpow.pop %v1204
    %v1206 = vadd.f32 %v1205, 1.0
    %v1207 = vrcp.pop %v1206
    %v1208 = vmul.f32 %v1206, %v1207
    %v1209 = vsub.f32 1.0, %v1208
    %v1210 = vmul.f32 %v1207, %v1209
    %v1211 = vadd.f32 %v1207, %v1210
    %vm1212 = vweird.f32 %v1206
    %vm1213 = vweird.f32 %v1207
    %vm1214 = vmor %vm1212, %vm1213
    %v1215 = vsel %vm1214, %v1207, %v1211
    %v1216 = vand.u32 2147483647, %v1206
    %vm1217 = vcmp.eq.f32.partialorder %v1216, 8.507059e+37
    %v1218 = vand.u32 %v1206, 2147483648
    %v1219 = vor.u32 1.1754944e-38, %v1218
    %v1220 = vsel %vm1217, %v1219, %v1215
    %v1221 = vmul.f32 1.0, %v1220
    %v1223 = vrot.slane %v1122, 6
    %v1225 = vmul.f32 %v1201, %v1223
    %v1226 = vmul.f32 %v1201, %v1202
    %1228 = vrot.lane.b32.xlu0 %v1226, 64
    %v1229 = vpop.permute.xlu0 %1228
    %v1231 = vadd.f32 %v1225, %v1229
    %v1232 = vtanh.pop %v1231
    %v1233 = vmul.f32 %v1221, %v1232
    %1235 = vrot.lane.b32.xlu0 %v1233, 64
    %v1236 = vpop.permute.xlu0 %1235
    %1238 = vst.msk [vmem:[#allocation2 + $0x8] sm:$0x30] %vm809, %v1236
    %v1239 = vrot.slane %v1233, 4
    %1240 = vrot.lane.b32.xlu0 %v1239, 64
    %v1241 = vpop.permute.xlu0 %1240
    %v1242 = vsel %vm490, %v1241, 0
    %1244 = vmatpush.msra.mxu0 0.0
    %1245 = vmatpush.msra.mxu0 0.0
    %1246 = vmatpush.msra.mxu0 0.0
    %1247 = vmatpush.msra.mxu0 0.0
    %1248 = vmatpush.msra.mxu0 0.0
    %1249 = vmatpush.msra.mxu0 0.0
    %1250 = vmatpush.msra.mxu0 0.0
    %1251 = vmatpush.msra.mxu0 0.0
    %1252 = vmatpush.msra.mxu0 %v486
    %1253 = vmatpush.msra.mxu0 %v484
    %1254 = vmatpush.msra.mxu0 %v482
    %1255 = vmatpush.msra.mxu0 %v480
    %1256 = vmatpush.msra.mxu0 %v478
    %1257 = vmatpush.msra.mxu0 %v476
    %1258 = vmatpush.msra.mxu0 %v474
    %1259 = vmatpush.msra.mxu0 %v472
    %1260 = vmatmul.f32.gmra.mxu0 %v1242
    %v1261 = vpop.f32.mrf.mxu0
    %v1262 = vadd.f32 0.0, %v1261
    %1263 = vdwg.mxu0
    %1264 = vmatpush.msra.mxu0 0.0
    %1265 = vmatpush.msra.mxu0 0.0
    %1266 = vmatpush.msra.mxu0 0.0
    %1267 = vmatpush.msra.mxu0 0.0
    %1268 = vmatpush.msra.mxu0 0.0
    %1269 = vmatpush.msra.mxu0 0.0
    %1270 = vmatpush.msra.mxu0 0.0
    %1271 = vmatpush.msra.mxu0 0.0
    %1272 = vmatpush.msra.mxu0 %v487
    %1273 = vmatpush.msra.mxu0 %v485
    %1274 = vmatpush.msra.mxu0 %v483
    %1275 = vmatpush.msra.mxu0 %v481
    %1276 = vmatpush.msra.mxu0 %v479
    %1277 = vmatpush.msra.mxu0 %v477
    %1278 = vmatpush.msra.mxu0 %v475
    %1279 = vmatpush.msra.mxu0 %v473
    %1280 = vmatmul.f32.gmra.mxu0 %v1242
    %v1281 = vpop.f32.mrf.mxu0
    %v1282 = vadd.f32 0.0, %v1281
    %1283 = vdwg.mxu0
    %v1286 = vrot.slane %v1262, 2
    %v1287 = vrot.slane %v1282, 2
    %v1290 = vadd.f32 %v470, %v1286
    %v1291 = vadd.f32 %v471, %v1287
    %v1292 = vxor.u32 %v1290, 2147483648
    %v1293 = vmul.f32 %v1292, 1.442695
    %v1294 = vpow.pop %v1293
    %v1295 = vadd.f32 %v1294, 1.0
    %v1296 = vrcp.pop %v1295
    %v1297 = vmul.f32 %v1295, %v1296
    %v1298 = vsub.f32 1.0, %v1297
    %v1299 = vmul.f32 %v1296, %v1298
    %v1300 = vadd.f32 %v1296, %v1299
    %vm1301 = vweird.f32 %v1295
    %vm1302 = vweird.f32 %v1296
    %vm1303 = vmor %vm1301, %vm1302
    %v1304 = vsel %vm1303, %v1296, %v1300
    %v1305 = vand.u32 2147483647, %v1295
    %vm1306 = vcmp.eq.f32.partialorder %v1305, 8.507059e+37
    %v1307 = vand.u32 %v1295, 2147483648
    %v1308 = vor.u32 1.1754944e-38, %v1307
    %v1309 = vsel %vm1306, %v1308, %v1304
    %v1310 = vmul.f32 1.0, %v1309
    %v1311 = vtanh.pop %v1291
    %v1312 = vxor.u32 %v1291, 2147483648
    %v1313 = vmul.f32 %v1312, 1.442695
    %v1314 = vpow.pop %v1313
    %v1315 = vadd.f32 %v1314, 1.0
    %v1316 = vrcp.pop %v1315
    %v1317 = vmul.f32 %v1315, %v1316
    %v1318 = vsub.f32 1.0, %v1317
    %v1319 = vmul.f32 %v1316, %v1318
    %v1320 = vadd.f32 %v1316, %v1319
    %vm1321 = vweird.f32 %v1315
    %vm1322 = vweird.f32 %v1316
    %vm1323 = vmor %vm1321, %vm1322
    %v1324 = vsel %vm1323, %v1316, %v1320
    %v1325 = vand.u32 2147483647, %v1315
    %vm1326 = vcmp.eq.f32.partialorder %v1325, 8.507059e+37
    %v1327 = vand.u32 %v1315, 2147483648
    %v1328 = vor.u32 1.1754944e-38, %v1327
    %v1329 = vsel %vm1326, %v1328, %v1324
    %v1330 = vmul.f32 1.0, %v1329
    %v1332 = vrot.slane %v1231, 6
    %v1334 = vmul.f32 %v1310, %v1332
    %v1335 = vmul.f32 %v1310, %v1311
    %1337 = vrot.lane.b32.xlu0 %v1335, 64
    %v1338 = vpop.permute.xlu0 %1337
    %v1340 = vadd.f32 %v1334, %v1338
    %v1341 = vtanh.pop %v1340
    %v1342 = vmul.f32 %v1330, %v1341
    %1344 = vrot.lane.b32.xlu0 %v1342, 64
    %v1345 = vpop.permute.xlu0 %1344
    %1347 = vst.msk [vmem:[#allocation2 + $0x8] sm:$0xc0] %vm919, %v1345
    %v1348 = vld [vmem:[#allocation2] sm:$0xff]
    %v1349 = vld [vmem:[#allocation2 + $0x8] sm:$0xff]
    %v1350 = vld [vmem:[%s16] sm:$0xff]
    %v1351 = vld [vmem:[%s16 + $0x8] sm:$0xff]
    %v1352 = vld [vmem:[%s16 + $0x10] sm:$0xff]
    %v1353 = vld [vmem:[%s16 + $0x18] sm:$0xff]
    %v1354 = vld [vmem:[%s16 + $0x20] sm:$0xff]
    %v1355 = vld [vmem:[%s16 + $0x28] sm:$0xff]
    %v1356 = vld [vmem:[%s16 + $0x30] sm:$0xff]
    %v1357 = vld [vmem:[%s16 + $0x38] sm:$0xff]
    %v1358 = vld [vmem:[%s17] sm:$0x1]
    %v1360 = vperm.slane %v1358, 0
    %v1363 = vsel %vm490, %v1348, 0
    %v1366 = vsel %vm490, %v1349, 0
    %1368 = vmatpush.msra.mxu0 0.0
    %1369 = vmatpush.msra.mxu0 0.0
    %1370 = vmatpush.msra.mxu0 0.0
    %1371 = vmatpush.msra.mxu0 0.0
    %1372 = vmatpush.msra.mxu0 0.0
    %1373 = vmatpush.msra.mxu0 0.0
    %1374 = vmatpush.msra.mxu0 0.0
    %1375 = vmatpush.msra.mxu0 0.0
    %1376 = vmatpush.msra.mxu0 %v1357
    %1377 = vmatpush.msra.mxu0 %v1356
    %1378 = vmatpush.msra.mxu0 %v1355
    %1379 = vmatpush.msra.mxu0 %v1354
    %1380 = vmatpush.msra.mxu0 %v1353
    %1381 = vmatpush.msra.mxu0 %v1352
    %1382 = vmatpush.msra.mxu0 %v1351
    %1383 = vmatpush.msra.mxu0 %v1350
    %1384 = vmatmul.f32.gmra.mxu0 %v1363
    %v1385 = vpop.f32.mrf.mxu0
    %v1386 = vadd.f32 %v1360, %v1385
    %1387 = vmatmul.f32.gmra.mxu0 %v1366
    %v1388 = vpop.f32.mrf.mxu0
    %v1389 = vadd.f32 %v1360, %v1388
    %1390 = vdwg.mxu0
    %v1391 = vmax.f32 %v1386, 0.0
    %v1392 = vmax.f32 %v1389, 0.0
    %v1393 = vld [vmem:[%s18] sm:$0xff]
    %v1394 = vld [vmem:[%s18 + $0x8] sm:$0xff]
    %v1395 = vld [vmem:[%s18 + $0x10] sm:$0xff]
    %v1396 = vld [vmem:[%s18 + $0x18] sm:$0xff]
    %v1397 = vld [vmem:[%s18 + $0x20] sm:$0xff]
    %v1398 = vld [vmem:[%s18 + $0x28] sm:$0xff]
    %v1399 = vld [vmem:[%s18 + $0x30] sm:$0xff]
    %v1400 = vld [vmem:[%s18 + $0x38] sm:$0xff]
    %v1401 = vld [vmem:[%s19] sm:$0x1]
    %v1403 = vperm.slane %v1401, 0
    %v1406 = vsel %vm490, %v1391, 0
    %v1409 = vsel %vm490, %v1392, 0
    %1411 = vmatpush.msra.mxu0 0.0
    %1412 = vmatpush.msra.mxu0 0.0
    %1413 = vmatpush.msra.mxu0 0.0
    %1414 = vmatpush.msra.mxu0 0.0
    %1415 = vmatpush.msra.mxu0 0.0
    %1416 = vmatpush.msra.mxu0 0.0
    %1417 = vmatpush.msra.mxu0 0.0
    %1418 = vmatpush.msra.mxu0 0.0
    %1419 = vmatpush.msra.mxu0 %v1400
    %1420 = vmatpush.msra.mxu0 %v1399
    %1421 = vmatpush.msra.mxu0 %v1398
    %1422 = vmatpush.msra.mxu0 %v1397
    %1423 = vmatpush.msra.mxu0 %v1396
    %1424 = vmatpush.msra.mxu0 %v1395
    %1425 = vmatpush.msra.mxu0 %v1394
    %1426 = vmatpush.msra.mxu0 %v1393
    %1427 = vmatmul.f32.gmra.mxu0 %v1406
    %v1428 = vpop.f32.mrf.mxu0
    %v1429 = vadd.f32 %v1403, %v1428
    %1430 = vmatmul.f32.gmra.mxu0 %v1409
    %v1431 = vpop.f32.mrf.mxu0
    %v1432 = vadd.f32 %v1403, %v1431
    %1433 = vdwg.mxu0
    %1434 = vst.msk [vmem:[%s20] sm:$0xff] %vm400, %v1429
    %1435 = vst.msk [vmem:[%s20 + $0x8] sm:$0xff] %vm400, %v1432
    // Predicated region
    $region106: #{tpu_custom_call.1} parent=1 // pred_check
      _
    $region107: #{tpu_custom_call.1} parent=1 // pred_check_branch
      %1437 = sbr.rel (0) target = $region109
    $region108: #{tpu_custom_call.1} parent=1 // pred_region
      _
    $region109: #{tpu_custom_call.1} parent=1 // pred_fallthru
      _
    // Predicated region
    $region110: #{tpu_custom_call.1} parent=1 // pred_check
      _
    $region111: #{tpu_custom_call.1} parent=1 // pred_check_branch
      %1439 = sbr.rel (0) target = $region113
    $region112: #{tpu_custom_call.1} parent=1 // pred_region
      _
    $region113: #{tpu_custom_call.1} parent=1 // pred_fallthru
      _
    %1440 = vsyncpa [#allocation4], 1
    %1441 = vsyncpa [#allocation6], 1
    %1442 = vsyncpa [#allocation9], 1
    %1443 = vsyncpa [#allocation12], 1

</llo_original>
